<compile_context>
chip_gen: v7x
topology: tpu7x:2x2x1
jax: 0.10.0
libtpu: 0.0.40
codegen_flags: <defaults>
</compile_context>

<pallas_src>
import functools
import math

import numpy as np
import jax
import jax.numpy as jnp
from jax import lax
from jax.experimental import pallas as pl
from jax.experimental.pallas import tpu as pltpu

LEAKY_SLOPE = 0.01          # nn.LeakyReLU() default negative_slope
GN_EPS = 1e-5               # nn.GroupNorm default eps
WGT_DTYPE = jnp.bfloat16    # MXU operand dtype for weights


def find_group_number(channels, min_group_channels=4, max_group_channels=32):
    for num_groups in range(channels, 0, -1):
        group_channels = channels // num_groups
        if (channels % num_groups == 0 and group_channels >= min_group_channels
                and group_channels <= max_group_channels):
            return num_groups
    return 1


# ---------------------------------------------------------------------------
# Host-side constants (hoisted out of the kernel body).
# ---------------------------------------------------------------------------
def _upsample_matrix(n_in, n_out):
    """(n_out, n_in) bilinear interpolation matrix, align_corners=True."""
    if n_out == 1:
        src = np.zeros((1,), np.float64)
    else:
        src = np.arange(n_out, dtype=np.float64) * (n_in - 1) / (n_out - 1)
    lo = np.clip(np.floor(src).astype(np.int64), 0, n_in - 1)
    hi = np.clip(lo + 1, 0, n_in - 1)
    f = (src - lo).astype(np.float32)
    u = np.zeros((n_out, n_in), np.float32)
    u[np.arange(n_out), lo] += 1.0 - f
    u[np.arange(n_out), hi] += f
    return u


def _build_interp_matrix(H0, W0, H, W, wp):
    """(H0*W0, H*wp) kron interpolation matrix with the width-pad baked in."""
    u = np.kron(_upsample_matrix(H0, H), _upsample_matrix(W0, W))   # (H*W, H0*W0)
    m = np.zeros((H, wp, H0 * W0), np.float32)
    m[:, 1:W + 1, :] = u.reshape(H, W, H0 * W0)
    return np.ascontiguousarray(m.reshape(H * wp, H0 * W0).T)


def _group_projector(cout, n_groups):
    """(Cout, Cout) same-group indicator matrix for GroupNorm stat broadcast."""
    cg = cout // n_groups
    gi = np.arange(cout)[:, None] // cg
    gj = np.arange(cout)[None, :] // cg
    return (gi == gj).astype(np.float32)


def _stack_conv3_weight(w):
    """PyTorch (Cout, Cin, 3, 3) -> (Cout, 9*Cin) with K index = tap*Cin + ci."""
    cout, cin = w.shape[0], w.shape[1]
    return jnp.transpose(w, (0, 2, 3, 1)).reshape(cout, 9 * cin)


def _padded_width(H, W):
    """Smallest wp >= W+2 with H*wp a multiple of 128 (lane-dense output)."""
    base = W + 2
    step = 128 // math.gcd(H, 128)
    padded = ((base + step - 1) // step) * step
    return padded if padded - base <= 32 else base


# ---------------------------------------------------------------------------
# The fused kernel body (one batch element per grid step).
# ---------------------------------------------------------------------------
def _fused_body(below_ref, above_ref, w1_ref, u_ref, wsk_ref, wm1_ref, wm2_ref,
                par_ref, proj_ref, mask_ref, o_ref,
                below_pad, xskip_pad, h_pad, *,
                H, W, wp, n_groups, cout):
    lc = H * wp
    cg = cout // n_groups
    inv_n = 1.0 / float(H * W * cg)

    mask = mask_ref[...]                                   # (1, lc)  f32
    proj = proj_ref[...]                                   # (Cout, Cout) f32
    par = par_ref[...]                                     # (Cout, 12) f32

    def gn_leaky(acc, stage):
        """GroupNorm + LeakyReLU on a (Cout, lc) f32 accumulator (masked stats)."""
        b = par[:, 3 * stage + 0:3 * stage + 1]
        g = par[:, 3 * stage + 1:3 * stage + 2]
        be = par[:, 3 * stage + 2:3 * stage + 3]
        acc = acc + b
        masked = acc * mask
        ch_sum = jnp.sum(masked, axis=-1, keepdims=True)            # (Cout, 1)
        ch_sq = jnp.sum(masked * acc, axis=-1, keepdims=True)       # sum(x^2*mask)
        stats = jnp.dot(proj, jnp.concatenate([ch_sum, ch_sq], axis=1),
                        preferred_element_type=jnp.float32) * inv_n  # (Cout, 2)
        mean = stats[:, 0:1]
        var = jnp.maximum(stats[:, 1:2] - mean * mean, 0.0)
        y = (acc - mean) * lax.rsqrt(var + GN_EPS) * g + be
        y = jnp.where(y >= 0, y, LEAKY_SLOPE * y)                    # LeakyReLU
        return y * mask                                              # pad cols -> 0

    def store_padded(pad_ref, y):
        """Write a width-padded (Cout, lc) slab into the (Cout, lp) padded layout."""
        pad_ref[...] = jnp.zeros_like(pad_ref)
        pad_ref[:, wp + 1:wp + 1 + lc] = y

    offsets = [ky * wp + kx for ky in range(3) for kx in range(3)]

    def conv3(w_stacked_bf16, arrays_f32):
        """3x3 conv as ONE matmul over 9 shifted windows stacked along K."""
        parts = []
        for off in offsets:
            for a in arrays_f32:
                parts.append(a[:, off:off + lc])
        windows = jnp.concatenate(parts, axis=0).astype(jnp.bfloat16)  # (K, lc)
        return jnp.dot(w_stacked_bf16, windows,
                       preferred_element_type=jnp.float32)             # (Cout, lc)

    # --- Stage 1: bilinear x2 upsample + Conv2d(1x1) + GN + LeakyReLU -------
    x0 = below_ref[0].astype(jnp.bfloat16)                 # (Cin, hw_in)
    t1 = jnp.dot(w1_ref[...], x0, preferred_element_type=jnp.float32)
    acc = jnp.dot(t1.astype(jnp.bfloat16), u_ref[...],
                  preferred_element_type=jnp.float32)      # (Cout, lc)
    y_up = gn_leaky(acc, 0)
    store_padded(below_pad, y_up)

    # --- Stage 2: skip conv on concat([below_up, above]) (never materialized)
    acc = conv3(wsk_ref[...], [below_pad[...], above_ref[0]])
    y_skip = gn_leaky(acc, 1)
    store_padded(xskip_pad, y_skip)

    # --- Stage 3: main conv 1 ------------------------------------------------
    acc = conv3(wm1_ref[...], [xskip_pad[...]])
    y1 = gn_leaky(acc, 2)
    store_padded(h_pad, y1)

    # --- Stage 4: main conv 2 + residual add of x_skip -----------------------
    acc = conv3(wm2_ref[...], [h_pad[...]])
    y2 = gn_leaky(acc, 3)
    out = y2 + xskip_pad[:, wp + 1:wp + 1 + lc]            # residual (f32, in VMEM)
    # TODO(synk): nn.Dropout implemented as eval-mode identity (no stochastic masking).
    o_ref[0] = out.astype(o_ref.dtype)


# ---------------------------------------------------------------------------
# Full forward pass (merge_mode='concat', up_mode='upsample', upsampling=True).
# ---------------------------------------------------------------------------
def up_convolution_block_forward(params, below_nchw, above_nchw):
    ng = params["n_groups"]
    B, Cin, H0, W0 = below_nchw.shape
    _, Cout, H, W = above_nchw.shape          # H = 2*H0, W = 2*W0
    assert H == 2 * H0 and W == 2 * W0
    wp = _padded_width(H, W)
    lc = H * wp
    lp = (H + 2) * wp + 2
    hw_in = H0 * W0

    # --- input prep (one-time layout ops on the kernel inputs) --------------
    below_flat = below_nchw.reshape(B, Cin, hw_in).astype(jnp.float32)
    above_pad = jnp.pad(above_nchw.astype(jnp.float32),
                        ((0, 0), (0, 0), (1, 1), (1, wp - W - 1)))
    above_pad = above_pad.reshape(B, Cout, (H + 2) * wp)
    above_pad = jnp.pad(above_pad, ((0, 0), (0, 0), (1, 1)))            # (B,Cout,lp)

    # --- constants (bf16 MXU weights, f32 affine/mask/projector) ------------
    w1 = params["up_conv"][0].reshape(Cout, Cin).astype(WGT_DTYPE)
    u_t = jnp.asarray(_build_interp_matrix(H0, W0, H, W, wp), dtype=WGT_DTYPE)
    wsk = _stack_conv3_weight(params["skip_conv"][0]).astype(WGT_DTYPE)   # (Cout,144)
    wm1 = _stack_conv3_weight(params["main1_conv"][0]).astype(WGT_DTYPE)  # (Cout, 72)
    wm2 = _stack_conv3_weight(params["main2_conv"][0]).astype(WGT_DTYPE)  # (Cout, 72)

    par_cols = []
    for name in ("up", "skip", "main1", "main2"):
        b = params[f"{name}_conv"][1]
        g, be = params[f"{name}_gn"]
        par_cols += [b, g, be]
    par = jnp.stack(par_cols, axis=1).astype(jnp.float32)               # (Cout, 12)

    proj = jnp.asarray(_group_projector(Cout, ng))
    mask2d = np.zeros((H, wp), np.float32)
    mask2d[:, 1:W + 1] = 1.0
    mask = jnp.asarray(mask2d.reshape(1, lc))

    kernel = functools.partial(_fused_body, H=H, W=W, wp=wp, n_groups=ng,
                               cout=Cout)

    out = pl.pallas_call(
        kernel,
        out_shape=jax.ShapeDtypeStruct((B, Cout, lc), jnp.float32),
        grid_spec=pltpu.PrefetchScalarGridSpec(
            num_scalar_prefetch=0,
            grid=(B,),
            in_specs=[
                pl.BlockSpec((1, Cin, hw_in), lambda i: (i, 0, 0)),   # below
                pl.BlockSpec((1, Cout, lp), lambda i: (i, 0, 0)),     # above (padded)
                pl.BlockSpec((Cout, Cin), lambda i: (0, 0)),          # w 1x1
                pl.BlockSpec((hw_in, lc), lambda i: (0, 0)),          # interp matrix
                pl.BlockSpec((Cout, 18 * Cout), lambda i: (0, 0)),    # skip weights
                pl.BlockSpec((Cout, 9 * Cout), lambda i: (0, 0)),     # main1 weights
                pl.BlockSpec((Cout, 9 * Cout), lambda i: (0, 0)),     # main2 weights
                pl.BlockSpec((Cout, 12), lambda i: (0, 0)),           # bias/gamma/beta
                pl.BlockSpec((Cout, Cout), lambda i: (0, 0)),         # group projector
                pl.BlockSpec((1, lc), lambda i: (0, 0)),              # valid-col mask
            ],
            out_specs=pl.BlockSpec((1, Cout, lc), lambda i: (i, 0, 0)),
            scratch_shapes=[
                pltpu.VMEM((Cout, lp), jnp.float32),   # below_up, padded layout
                pltpu.VMEM((Cout, lp), jnp.float32),   # x_skip,   padded layout
                pltpu.VMEM((Cout, lp), jnp.float32),   # main1 out, padded layout
            ],
        ),
        compiler_params=pltpu.CompilerParams(
            dimension_semantics=("parallel",),
            vmem_limit_bytes=32 * 1024 * 1024),
    )(below_flat, above_pad, w1, u_t, wsk, wm1, wm2, par, proj, mask)

    # Drop the zero pad columns -> NCHW output.
    return out.reshape(B, Cout, H, wp)[:, :, :, 1:W + 1]


# ---------------------------------------------------------------------------
# Parameters (deterministic synthetic init, PyTorch-like shapes).
# ---------------------------------------------------------------------------
def init_params(key, in_channels, out_channels):
    n_groups = find_group_number(out_channels)
    ks = jax.random.split(key, 8)

    def conv_init(k, cout, cin, ksz):
        kw, kb = jax.random.split(k)
        fan_in = cin * ksz * ksz
        bound = 1.0 / jnp.sqrt(jnp.float32(fan_in))
        w = jax.random.uniform(kw, (cout, cin, ksz, ksz), jnp.float32,
                               -bound, bound)
        b = jax.random.uniform(kb, (cout,), jnp.float32, -bound, bound)
        return w, b

    def gn_init(k, c):
        kg, kb = jax.random.split(k)
        gamma = 1.0 + 0.1 * jax.random.normal(kg, (c,), jnp.float32)
        beta = 0.1 * jax.random.normal(kb, (c,), jnp.float32)
        return gamma, beta

    return {
        "n_groups": n_groups,
        "up_conv": conv_init(ks[0], out_channels, in_channels, 1),
        "up_gn": gn_init(ks[1], out_channels),
        "skip_conv": conv_init(ks[2], out_channels, 2 * out_channels, 3),
        "skip_gn": gn_init(ks[3], out_channels),
        "main1_conv": conv_init(ks[4], out_channels, out_channels, 3),
        "main1_gn": gn_init(ks[5], out_channels),
        "main2_conv": conv_init(ks[6], out_channels, out_channels, 3),
        "main2_gn": gn_init(ks[7], out_channels),
    }


# ---------------------------------------------------------------------------
# Pure-JAX f32 reference (numerical sanity check).
# ---------------------------------------------------------------------------
def bilinear_upsample_x2(x_nhwc):
    B, H, W, C = x_nhwc.shape
    Ho, Wo = 2 * H, 2 * W

    def src_coords(n_in, n_out):
        src = jnp.arange(n_out, dtype=jnp.float32) * (n_in - 1) / (n_out - 1)
        lo = jnp.clip(jnp.floor(src).astype(jnp.int32), 0, n_in - 1)
        hi = jnp.clip(lo + 1, 0, n_in - 1)
        return lo, hi, src - lo.astype(jnp.float32)

    h_lo, h_hi, h_f = src_coords(H, Ho)
    w_lo, w_hi, w_f = src_coords(W, Wo)
    xh = (x_nhwc[:, h_lo] * (1.0 - h_f)[None, :, None, None]
          + x_nhwc[:, h_hi] * h_f[None, :, None, None])
    return (xh[:, :, w_lo] * (1.0 - w_f)[None, None, :, None]
            + xh[:, :, w_hi] * w_f[None, None, :, None])


def _ref_conv_gn_act(x, w, b, gamma, beta, n_groups, ksz):
    pad = ksz // 2
    y = lax.conv_general_dilated(
        x, jnp.transpose(w, (2, 3, 1, 0)),
        window_strides=(1, 1), padding=[(pad, pad), (pad, pad)],
        dimension_numbers=("NHWC", "HWIO", "NHWC"))
    y = y + b
    B, H, W, C = y.shape
    cg = C // n_groups
    yg = y.reshape(B, H, W, n_groups, cg)
    mean = jnp.mean(yg, axis=(1, 2, 4), keepdims=True)
    var = jnp.mean((yg - mean) ** 2, axis=(1, 2, 4), keepdims=True)
    yg = (yg - mean) / jnp.sqrt(var + GN_EPS)
    y = yg.reshape(B, H, W, C) * gamma + beta
    return jnp.where(y >= 0, y, LEAKY_SLOPE * y)


def reference_forward(params, below_nchw, above_nchw):
    ng = params["n_groups"]
    below = jnp.transpose(below_nchw, (0, 2, 3, 1))
    above = jnp.transpose(above_nchw, (0, 2, 3, 1))
    below = bilinear_upsample_x2(below)
    w, b = params["up_conv"]; g, be = params["up_gn"]
    below = _ref_conv_gn_act(below, w, b, g, be, ng, 1)
    x = jnp.concatenate([below, above], axis=-1)
    w, b = params["skip_conv"]; g, be = params["skip_gn"]
    x_skip = _ref_conv_gn_act(x, w, b, g, be, ng, 3)
    w, b = params["main1_conv"]; g, be = params["main1_gn"]
    h = _ref_conv_gn_act(x_skip, w, b, g, be, ng, 3)
    w, b = params["main2_conv"]; g, be = params["main2_gn"]
    out = _ref_conv_gn_act(h, w, b, g, be, ng, 3) + x_skip
    return jnp.transpose(out, (0, 3, 1, 2))


if __name__ == "__main__":
    in_channels, out_channels = 16, 8     # n_groups = 2
    B, H0, W0 = 2, 8, 8                   # `below` spatial; `above` is 2x

    key = jax.random.PRNGKey(0)
    kp, kb, ka = jax.random.split(key, 3)
    params = init_params(kp, in_channels, out_channels)
    below = jax.random.normal(kb, (B, in_channels, H0, W0), jnp.float32)
    above = jax.random.normal(ka, (B, out_channels, 2 * H0, 2 * W0), jnp.float32)

    fwd = jax.jit(functools.partial(up_convolution_block_forward, params))
    out = jax.block_until_ready(fwd(below, above))
    assert out.shape == (B, out_channels, 2 * H0, 2 * W0)
    assert bool(jnp.all(jnp.isfinite(out)))

    ref = jax.block_until_ready(reference_forward(params, below, above))
    max_err = float(jnp.max(jnp.abs(out - ref)))
    mean_err = float(jnp.mean(jnp.abs(out - ref)))
    # MXU operands (weights, interpolation matrix, per-dot activations) are
    # bf16 with f32 accumulation; allow the corresponding small relative error
    # accumulated over 4 layers (layout bugs would show up as O(1) errors).
    assert max_err < 2e-1 and mean_err < 3e-2, (max_err, mean_err)

    print("KERNEL_OK")
</pallas_src>

<mosaic_0001>
module attributes {stable_mosaic.version = 11 : i64} {
  func.func @_fused_body(%arg0: i32, %arg1: memref<1x16x64xf32, #tpu.memory_space<vmem>>, %arg2: memref<1x8x434xf32, #tpu.memory_space<vmem>>, %arg3: memref<8x16xbf16, #tpu.memory_space<vmem>>, %arg4: memref<64x384xbf16, #tpu.memory_space<vmem>>, %arg5: memref<8x144xbf16, #tpu.memory_space<vmem>>, %arg6: memref<8x72xbf16, #tpu.memory_space<vmem>>, %arg7: memref<8x72xbf16, #tpu.memory_space<vmem>>, %arg8: memref<8x12xf32, #tpu.memory_space<vmem>>, %arg9: memref<8x8xf32, #tpu.memory_space<vmem>>, %arg10: memref<1x384xf32, #tpu.memory_space<vmem>>, %arg11: memref<1x8x384xf32, #tpu.memory_space<vmem>>, %arg12: memref<8x434xf32, #tpu.memory_space<vmem>>, %arg13: memref<8x434xf32, #tpu.memory_space<vmem>>, %arg14: memref<8x434xf32, #tpu.memory_space<vmem>>) attributes {dimension_semantics = [#tpu.dimension_semantics<parallel>], iteration_bounds = array<i64: 2>, scalar_prefetch = 0 : i64, scratch_operands = 3 : i64, tpu.core_type = #tpu.core_type<tc>, window_params = [{transform_indices = @transform_0, window_bounds = array<i64: 1, 16, 64>}, {transform_indices = @transform_1, window_bounds = array<i64: 1, 8, 434>}, {pipeline_mode = #tpu.pipeline_mode<synchronous>, transform_indices = @transform_2, window_bounds = array<i64: 8, 16>}, {pipeline_mode = #tpu.pipeline_mode<synchronous>, transform_indices = @transform_3, window_bounds = array<i64: 64, 384>}, {pipeline_mode = #tpu.pipeline_mode<synchronous>, transform_indices = @transform_4, window_bounds = array<i64: 8, 144>}, {pipeline_mode = #tpu.pipeline_mode<synchronous>, transform_indices = @transform_5, window_bounds = array<i64: 8, 72>}, {pipeline_mode = #tpu.pipeline_mode<synchronous>, transform_indices = @transform_6, window_bounds = array<i64: 8, 72>}, {pipeline_mode = #tpu.pipeline_mode<synchronous>, transform_indices = @transform_7, window_bounds = array<i64: 8, 12>}, {pipeline_mode = #tpu.pipeline_mode<synchronous>, transform_indices = @transform_8, window_bounds = array<i64: 8, 8>}, {pipeline_mode = #tpu.pipeline_mode<synchronous>, transform_indices = @transform_9, window_bounds = array<i64: 1, 384>}, {transform_indices = @transform_10, window_bounds = array<i64: 1, 8, 384>}]} {
    %c0 = arith.constant 0 : index
    %c0_0 = arith.constant 0 : index
    %0 = vector.load %arg10[%c0, %c0_0] : memref<1x384xf32, #tpu.memory_space<vmem>>, vector<1x384xf32>
    %c0_1 = arith.constant 0 : index
    %c0_2 = arith.constant 0 : index
    %1 = vector.load %arg9[%c0_1, %c0_2] : memref<8x8xf32, #tpu.memory_space<vmem>>, vector<8x8xf32>
    %c0_3 = arith.constant 0 : index
    %c0_4 = arith.constant 0 : index
    %2 = vector.load %arg8[%c0_3, %c0_4] : memref<8x12xf32, #tpu.memory_space<vmem>>, vector<8x12xf32>
    %c0_5 = arith.constant 0 : index
    %c0_6 = arith.constant 0 : index
    %c0_7 = arith.constant 0 : index
    %3 = vector.load %arg1[%c0_5, %c0_6, %c0_7] : memref<1x16x64xf32, #tpu.memory_space<vmem>>, vector<1x16x64xf32>
    %4 = vector.shape_cast %3 : vector<1x16x64xf32> to vector<16x64xf32>
    %5 = arith.truncf %4 : vector<16x64xf32> to vector<16x64xbf16>
    %c0_8 = arith.constant 0 : index
    %c0_9 = arith.constant 0 : index
    %6 = vector.load %arg3[%c0_8, %c0_9] : memref<8x16xbf16, #tpu.memory_space<vmem>>, vector<8x16xbf16>
    %cst = arith.constant dense<0.000000e+00> : vector<8x64xf32>
    %7 = tpu.matmul %6, %5, %cst {dimension_numbers = #tpu.dot_dimension_numbers<[1], [0], [0], [1], [0, 0, 1, 1], [], []>} : vector<8x16xbf16>, vector<16x64xbf16>, vector<8x64xf32> -> vector<8x64xf32>
    %8 = arith.truncf %7 : vector<8x64xf32> to vector<8x64xbf16>
    %c0_10 = arith.constant 0 : index
    %c0_11 = arith.constant 0 : index
    %9 = vector.load %arg4[%c0_10, %c0_11] : memref<64x384xbf16, #tpu.memory_space<vmem>>, vector<64x384xbf16>
    %cst_12 = arith.constant dense<0.000000e+00> : vector<8x384xf32>
    %10 = tpu.matmul %8, %9, %cst_12 {dimension_numbers = #tpu.dot_dimension_numbers<[1], [0], [0], [1], [0, 0, 1, 1], [], []>} : vector<8x64xbf16>, vector<64x384xbf16>, vector<8x384xf32> -> vector<8x384xf32>
    %11 = vector.extract_strided_slice %2 {offsets = [0, 0], sizes = [8, 1], strides = [1, 1]} : vector<8x12xf32> to vector<8x1xf32>
    %12 = vector.extract_strided_slice %2 {offsets = [0, 1], sizes = [8, 1], strides = [1, 1]} : vector<8x12xf32> to vector<8x1xf32>
    %13 = vector.extract_strided_slice %2 {offsets = [0, 2], sizes = [8, 1], strides = [1, 1]} : vector<8x12xf32> to vector<8x1xf32>
    %14 = vector.broadcast %11 : vector<8x1xf32> to vector<8x384xf32>
    %15 = arith.addf %10, %14 : vector<8x384xf32>
    %16 = vector.broadcast %0 : vector<1x384xf32> to vector<8x384xf32>
    %17 = arith.mulf %15, %16 : vector<8x384xf32>
    %cst_13 = arith.constant dense<0.000000e+00> : vector<8xf32>
    %18 = vector.multi_reduction <add>, %17, %cst_13 [1] : vector<8x384xf32> to vector<8xf32>
    %19 = vector.shape_cast %18 : vector<8xf32> to vector<8x1xf32>
    %20 = arith.mulf %17, %15 : vector<8x384xf32>
    %cst_14 = arith.constant dense<0.000000e+00> : vector<8xf32>
    %21 = vector.multi_reduction <add>, %20, %cst_14 [1] : vector<8x384xf32> to vector<8xf32>
    %22 = vector.shape_cast %21 : vector<8xf32> to vector<8x1xf32>
    %23 = tpu.concatenate %19, %22 in 1 : vector<8x1xf32>, vector<8x1xf32> -> vector<8x2xf32>
    %cst_15 = arith.constant dense<0.000000e+00> : vector<8x2xf32>
    %24 = tpu.matmul %1, %23, %cst_15 {dimension_numbers = #tpu.dot_dimension_numbers<[1], [0], [0], [1], [0, 0, 1, 1], [], []>} : vector<8x8xf32>, vector<8x2xf32>, vector<8x2xf32> -> vector<8x2xf32>
    %cst_16 = arith.constant 9.765625E-4 : f32
    %25 = vector.broadcast %cst_16 : f32 to vector<8x2xf32>
    %26 = arith.mulf %24, %25 : vector<8x2xf32>
    %27 = vector.extract_strided_slice %26 {offsets = [0, 0], sizes = [8, 1], strides = [1, 1]} : vector<8x2xf32> to vector<8x1xf32>
    %28 = vector.extract_strided_slice %26 {offsets = [0, 1], sizes = [8, 1], strides = [1, 1]} : vector<8x2xf32> to vector<8x1xf32>
    %29 = arith.mulf %27, %27 : vector<8x1xf32>
    %30 = arith.subf %28, %29 : vector<8x1xf32>
    %cst_17 = arith.constant 0.000000e+00 : f32
    %31 = vector.broadcast %cst_17 : f32 to vector<8x1xf32>
    %32 = arith.maximumf %30, %31 : vector<8x1xf32>
    %33 = vector.broadcast %27 : vector<8x1xf32> to vector<8x384xf32>
    %34 = arith.subf %15, %33 : vector<8x384xf32>
    %cst_18 = arith.constant 9.99999974E-6 : f32
    %35 = vector.broadcast %cst_18 : f32 to vector<8x1xf32>
    %36 = arith.addf %32, %35 : vector<8x1xf32>
    %37 = math.rsqrt %36 : vector<8x1xf32>
    %38 = vector.broadcast %37 : vector<8x1xf32> to vector<8x384xf32>
    %39 = arith.mulf %34, %38 : vector<8x384xf32>
    %40 = vector.broadcast %12 : vector<8x1xf32> to vector<8x384xf32>
    %41 = arith.mulf %39, %40 : vector<8x384xf32>
    %42 = vector.broadcast %13 : vector<8x1xf32> to vector<8x384xf32>
    %43 = arith.addf %41, %42 : vector<8x384xf32>
    %cst_19 = arith.constant 0.000000e+00 : f32
    %44 = vector.broadcast %cst_19 : f32 to vector<8x384xf32>
    %45 = arith.cmpf oge, %43, %44 : vector<8x384xf32>
    %cst_20 = arith.constant 0.00999999977 : f32
    %46 = vector.broadcast %cst_20 : f32 to vector<8x384xf32>
    %47 = arith.mulf %46, %43 : vector<8x384xf32>
    %48 = arith.select %45, %43, %47 : vector<8x384xi1>, vector<8x384xf32>
    %49 = vector.broadcast %0 : vector<1x384xf32> to vector<8x384xf32>
    %50 = arith.mulf %48, %49 : vector<8x384xf32>
    %cst_21 = arith.constant 0.000000e+00 : f32
    %51 = vector.broadcast %cst_21 : f32 to vector<8x434xf32>
    %c0_22 = arith.constant 0 : index
    %c0_23 = arith.constant 0 : index
    %52 = vector.load %arg12[%c0_22, %c0_23] : memref<8x434xf32, #tpu.memory_space<vmem>>, vector<8x434xf32>
    tpu.vector_store %arg12[%c0_22, %c0_23], %51 {strides = array<i32>} : memref<8x434xf32, #tpu.memory_space<vmem>>, vector<8x434xf32>,
    %c0_24 = arith.constant 0 : index
    %c25 = arith.constant 25 : index
    %53 = vector.load %arg12[%c0_24, %c25] : memref<8x434xf32, #tpu.memory_space<vmem>>, vector<8x384xf32>
    tpu.vector_store %arg12[%c0_24, %c25], %50 {strides = array<i32>} : memref<8x434xf32, #tpu.memory_space<vmem>>, vector<8x384xf32>,
    %c0_25 = arith.constant 0 : index
    %c0_26 = arith.constant 0 : index
    %54 = vector.load %arg5[%c0_25, %c0_26] : memref<8x144xbf16, #tpu.memory_space<vmem>>, vector<8x144xbf16>
    %c0_27 = arith.constant 0 : index
    %c0_28 = arith.constant 0 : index
    %55 = vector.load %arg12[%c0_27, %c0_28] : memref<8x434xf32, #tpu.memory_space<vmem>>, vector<8x434xf32>
    %c0_29 = arith.constant 0 : index
    %c0_30 = arith.constant 0 : index
    %c0_31 = arith.constant 0 : index
    %56 = vector.load %arg2[%c0_29, %c0_30, %c0_31] : memref<1x8x434xf32, #tpu.memory_space<vmem>>, vector<1x8x434xf32>
    %57 = vector.shape_cast %56 : vector<1x8x434xf32> to vector<8x434xf32>
    %58 = vector.extract_strided_slice %55 {offsets = [0, 0], sizes = [8, 384], strides = [1, 1]} : vector<8x434xf32> to vector<8x384xf32>
    %59 = vector.extract_strided_slice %57 {offsets = [0, 0], sizes = [8, 384], strides = [1, 1]} : vector<8x434xf32> to vector<8x384xf32>
    %60 = vector.extract_strided_slice %55 {offsets = [0, 1], sizes = [8, 384], strides = [1, 1]} : vector<8x434xf32> to vector<8x384xf32>
    %61 = vector.extract_strided_slice %57 {offsets = [0, 1], sizes = [8, 384], strides = [1, 1]} : vector<8x434xf32> to vector<8x384xf32>
    %62 = vector.extract_strided_slice %55 {offsets = [0, 2], sizes = [8, 384], strides = [1, 1]} : vector<8x434xf32> to vector<8x384xf32>
    %63 = vector.extract_strided_slice %57 {offsets = [0, 2], sizes = [8, 384], strides = [1, 1]} : vector<8x434xf32> to vector<8x384xf32>
    %64 = vector.extract_strided_slice %55 {offsets = [0, 24], sizes = [8, 384], strides = [1, 1]} : vector<8x434xf32> to vector<8x384xf32>
    %65 = vector.extract_strided_slice %57 {offsets = [0, 24], sizes = [8, 384], strides = [1, 1]} : vector<8x434xf32> to vector<8x384xf32>
    %66 = vector.extract_strided_slice %55 {offsets = [0, 25], sizes = [8, 384], strides = [1, 1]} : vector<8x434xf32> to vector<8x384xf32>
    %67 = vector.extract_strided_slice %57 {offsets = [0, 25], sizes = [8, 384], strides = [1, 1]} : vector<8x434xf32> to vector<8x384xf32>
    %68 = vector.extract_strided_slice %55 {offsets = [0, 26], sizes = [8, 384], strides = [1, 1]} : vector<8x434xf32> to vector<8x384xf32>
    %69 = vector.extract_strided_slice %57 {offsets = [0, 26], sizes = [8, 384], strides = [1, 1]} : vector<8x434xf32> to vector<8x384xf32>
    %70 = vector.extract_strided_slice %55 {offsets = [0, 48], sizes = [8, 384], strides = [1, 1]} : vector<8x434xf32> to vector<8x384xf32>
    %71 = vector.extract_strided_slice %57 {offsets = [0, 48], sizes = [8, 384], strides = [1, 1]} : vector<8x434xf32> to vector<8x384xf32>
    %72 = vector.extract_strided_slice %55 {offsets = [0, 49], sizes = [8, 384], strides = [1, 1]} : vector<8x434xf32> to vector<8x384xf32>
    %73 = vector.extract_strided_slice %57 {offsets = [0, 49], sizes = [8, 384], strides = [1, 1]} : vector<8x434xf32> to vector<8x384xf32>
    %74 = vector.extract_strided_slice %55 {offsets = [0, 50], sizes = [8, 384], strides = [1, 1]} : vector<8x434xf32> to vector<8x384xf32>
    %75 = vector.extract_strided_slice %57 {offsets = [0, 50], sizes = [8, 384], strides = [1, 1]} : vector<8x434xf32> to vector<8x384xf32>
    %76 = tpu.concatenate %58, %59, %60, %61, %62, %63, %64, %65, %66, %67, %68, %69, %70, %71, %72, %73 in 0 : vector<8x384xf32>, vector<8x384xf32>, vector<8x384xf32>, vector<8x384xf32>, vector<8x384xf32>, vector<8x384xf32>, vector<8x384xf32>, vector<8x384xf32>, vector<8x384xf32>, vector<8x384xf32>, vector<8x384xf32>, vector<8x384xf32>, vector<8x384xf32>, vector<8x384xf32>, vector<8x384xf32>, vector<8x384xf32> -> vector<128x384xf32>
    %77 = tpu.concatenate %74, %75 in 0 : vector<8x384xf32>, vector<8x384xf32> -> vector<16x384xf32>
    %78 = tpu.concatenate %76, %77 in 0 : vector<128x384xf32>, vector<16x384xf32> -> vector<144x384xf32>
    %79 = arith.truncf %78 : vector<144x384xf32> to vector<144x384xbf16>
    %cst_32 = arith.constant dense<0.000000e+00> : vector<8x384xf32>
    %80 = tpu.matmul %54, %79, %cst_32 {dimension_numbers = #tpu.dot_dimension_numbers<[1], [0], [0], [1], [0, 0, 1, 1], [], []>} : vector<8x144xbf16>, vector<144x384xbf16>, vector<8x384xf32> -> vector<8x384xf32>
    %81 = vector.extract_strided_slice %2 {offsets = [0, 3], sizes = [8, 1], strides = [1, 1]} : vector<8x12xf32> to vector<8x1xf32>
    %82 = vector.extract_strided_slice %2 {offsets = [0, 4], sizes = [8, 1], strides = [1, 1]} : vector<8x12xf32> to vector<8x1xf32>
    %83 = vector.extract_strided_slice %2 {offsets = [0, 5], sizes = [8, 1], strides = [1, 1]} : vector<8x12xf32> to vector<8x1xf32>
    %84 = vector.broadcast %81 : vector<8x1xf32> to vector<8x384xf32>
    %85 = arith.addf %80, %84 : vector<8x384xf32>
    %86 = vector.broadcast %0 : vector<1x384xf32> to vector<8x384xf32>
    %87 = arith.mulf %85, %86 : vector<8x384xf32>
    %cst_33 = arith.constant dense<0.000000e+00> : vector<8xf32>
    %88 = vector.multi_reduction <add>, %87, %cst_33 [1] : vector<8x384xf32> to vector<8xf32>
    %89 = vector.shape_cast %88 : vector<8xf32> to vector<8x1xf32>
    %90 = arith.mulf %87, %85 : vector<8x384xf32>
    %cst_34 = arith.constant dense<0.000000e+00> : vector<8xf32>
    %91 = vector.multi_reduction <add>, %90, %cst_34 [1] : vector<8x384xf32> to vector<8xf32>
    %92 = vector.shape_cast %91 : vector<8xf32> to vector<8x1xf32>
    %93 = tpu.concatenate %89, %92 in 1 : vector<8x1xf32>, vector<8x1xf32> -> vector<8x2xf32>
    %cst_35 = arith.constant dense<0.000000e+00> : vector<8x2xf32>
    %94 = tpu.matmul %1, %93, %cst_35 {dimension_numbers = #tpu.dot_dimension_numbers<[1], [0], [0], [1], [0, 0, 1, 1], [], []>} : vector<8x8xf32>, vector<8x2xf32>, vector<8x2xf32> -> vector<8x2xf32>
    %cst_36 = arith.constant 9.765625E-4 : f32
    %95 = vector.broadcast %cst_36 : f32 to vector<8x2xf32>
    %96 = arith.mulf %94, %95 : vector<8x2xf32>
    %97 = vector.extract_strided_slice %96 {offsets = [0, 0], sizes = [8, 1], strides = [1, 1]} : vector<8x2xf32> to vector<8x1xf32>
    %98 = vector.extract_strided_slice %96 {offsets = [0, 1], sizes = [8, 1], strides = [1, 1]} : vector<8x2xf32> to vector<8x1xf32>
    %99 = arith.mulf %97, %97 : vector<8x1xf32>
    %100 = arith.subf %98, %99 : vector<8x1xf32>
    %cst_37 = arith.constant 0.000000e+00 : f32
    %101 = vector.broadcast %cst_37 : f32 to vector<8x1xf32>
    %102 = arith.maximumf %100, %101 : vector<8x1xf32>
    %103 = vector.broadcast %97 : vector<8x1xf32> to vector<8x384xf32>
    %104 = arith.subf %85, %103 : vector<8x384xf32>
    %cst_38 = arith.constant 9.99999974E-6 : f32
    %105 = vector.broadcast %cst_38 : f32 to vector<8x1xf32>
    %106 = arith.addf %102, %105 : vector<8x1xf32>
    %107 = math.rsqrt %106 : vector<8x1xf32>
    %108 = vector.broadcast %107 : vector<8x1xf32> to vector<8x384xf32>
    %109 = arith.mulf %104, %108 : vector<8x384xf32>
    %110 = vector.broadcast %82 : vector<8x1xf32> to vector<8x384xf32>
    %111 = arith.mulf %109, %110 : vector<8x384xf32>
    %112 = vector.broadcast %83 : vector<8x1xf32> to vector<8x384xf32>
    %113 = arith.addf %111, %112 : vector<8x384xf32>
    %cst_39 = arith.constant 0.000000e+00 : f32
    %114 = vector.broadcast %cst_39 : f32 to vector<8x384xf32>
    %115 = arith.cmpf oge, %113, %114 : vector<8x384xf32>
    %cst_40 = arith.constant 0.00999999977 : f32
    %116 = vector.broadcast %cst_40 : f32 to vector<8x384xf32>
    %117 = arith.mulf %116, %113 : vector<8x384xf32>
    %118 = arith.select %115, %113, %117 : vector<8x384xi1>, vector<8x384xf32>
    %119 = vector.broadcast %0 : vector<1x384xf32> to vector<8x384xf32>
    %120 = arith.mulf %118, %119 : vector<8x384xf32>
    %cst_41 = arith.constant 0.000000e+00 : f32
    %121 = vector.broadcast %cst_41 : f32 to vector<8x434xf32>
    %c0_42 = arith.constant 0 : index
    %c0_43 = arith.constant 0 : index
    %122 = vector.load %arg13[%c0_42, %c0_43] : memref<8x434xf32, #tpu.memory_space<vmem>>, vector<8x434xf32>
    tpu.vector_store %arg13[%c0_42, %c0_43], %121 {strides = array<i32>} : memref<8x434xf32, #tpu.memory_space<vmem>>, vector<8x434xf32>,
    %c0_44 = arith.constant 0 : index
    %c25_45 = arith.constant 25 : index
    %123 = vector.load %arg13[%c0_44, %c25_45] : memref<8x434xf32, #tpu.memory_space<vmem>>, vector<8x384xf32>
    tpu.vector_store %arg13[%c0_44, %c25_45], %120 {strides = array<i32>} : memref<8x434xf32, #tpu.memory_space<vmem>>, vector<8x384xf32>,
    %c0_46 = arith.constant 0 : index
    %c0_47 = arith.constant 0 : index
    %124 = vector.load %arg6[%c0_46, %c0_47] : memref<8x72xbf16, #tpu.memory_space<vmem>>, vector<8x72xbf16>
    %c0_48 = arith.constant 0 : index
    %c0_49 = arith.constant 0 : index
    %125 = vector.load %arg13[%c0_48, %c0_49] : memref<8x434xf32, #tpu.memory_space<vmem>>, vector<8x434xf32>
    %126 = vector.extract_strided_slice %125 {offsets = [0, 0], sizes = [8, 384], strides = [1, 1]} : vector<8x434xf32> to vector<8x384xf32>
    %127 = vector.extract_strided_slice %125 {offsets = [0, 1], sizes = [8, 384], strides = [1, 1]} : vector<8x434xf32> to vector<8x384xf32>
    %128 = vector.extract_strided_slice %125 {offsets = [0, 2], sizes = [8, 384], strides = [1, 1]} : vector<8x434xf32> to vector<8x384xf32>
    %129 = vector.extract_strided_slice %125 {offsets = [0, 24], sizes = [8, 384], strides = [1, 1]} : vector<8x434xf32> to vector<8x384xf32>
    %130 = vector.extract_strided_slice %125 {offsets = [0, 25], sizes = [8, 384], strides = [1, 1]} : vector<8x434xf32> to vector<8x384xf32>
    %131 = vector.extract_strided_slice %125 {offsets = [0, 26], sizes = [8, 384], strides = [1, 1]} : vector<8x434xf32> to vector<8x384xf32>
    %132 = vector.extract_strided_slice %125 {offsets = [0, 48], sizes = [8, 384], strides = [1, 1]} : vector<8x434xf32> to vector<8x384xf32>
    %133 = vector.extract_strided_slice %125 {offsets = [0, 49], sizes = [8, 384], strides = [1, 1]} : vector<8x434xf32> to vector<8x384xf32>
    %134 = vector.extract_strided_slice %125 {offsets = [0, 50], sizes = [8, 384], strides = [1, 1]} : vector<8x434xf32> to vector<8x384xf32>
    %135 = tpu.concatenate %126, %127, %128, %129, %130, %131, %132, %133, %134 in 0 : vector<8x384xf32>, vector<8x384xf32>, vector<8x384xf32>, vector<8x384xf32>, vector<8x384xf32>, vector<8x384xf32>, vector<8x384xf32>, vector<8x384xf32>, vector<8x384xf32> -> vector<72x384xf32>
    %136 = arith.truncf %135 : vector<72x384xf32> to vector<72x384xbf16>
    %cst_50 = arith.constant dense<0.000000e+00> : vector<8x384xf32>
    %137 = tpu.matmul %124, %136, %cst_50 {dimension_numbers = #tpu.dot_dimension_numbers<[1], [0], [0], [1], [0, 0, 1, 1], [], []>} : vector<8x72xbf16>, vector<72x384xbf16>, vector<8x384xf32> -> vector<8x384xf32>
    %138 = vector.extract_strided_slice %2 {offsets = [0, 6], sizes = [8, 1], strides = [1, 1]} : vector<8x12xf32> to vector<8x1xf32>
    %139 = vector.extract_strided_slice %2 {offsets = [0, 7], sizes = [8, 1], strides = [1, 1]} : vector<8x12xf32> to vector<8x1xf32>
    %140 = vector.extract_strided_slice %2 {offsets = [0, 8], sizes = [8, 1], strides = [1, 1]} : vector<8x12xf32> to vector<8x1xf32>
    %141 = vector.broadcast %138 : vector<8x1xf32> to vector<8x384xf32>
    %142 = arith.addf %137, %141 : vector<8x384xf32>
    %143 = vector.broadcast %0 : vector<1x384xf32> to vector<8x384xf32>
    %144 = arith.mulf %142, %143 : vector<8x384xf32>
    %cst_51 = arith.constant dense<0.000000e+00> : vector<8xf32>
    %145 = vector.multi_reduction <add>, %144, %cst_51 [1] : vector<8x384xf32> to vector<8xf32>
    %146 = vector.shape_cast %145 : vector<8xf32> to vector<8x1xf32>
    %147 = arith.mulf %144, %142 : vector<8x384xf32>
    %cst_52 = arith.constant dense<0.000000e+00> : vector<8xf32>
    %148 = vector.multi_reduction <add>, %147, %cst_52 [1] : vector<8x384xf32> to vector<8xf32>
    %149 = vector.shape_cast %148 : vector<8xf32> to vector<8x1xf32>
    %150 = tpu.concatenate %146, %149 in 1 : vector<8x1xf32>, vector<8x1xf32> -> vector<8x2xf32>
    %cst_53 = arith.constant dense<0.000000e+00> : vector<8x2xf32>
    %151 = tpu.matmul %1, %150, %cst_53 {dimension_numbers = #tpu.dot_dimension_numbers<[1], [0], [0], [1], [0, 0, 1, 1], [], []>} : vector<8x8xf32>, vector<8x2xf32>, vector<8x2xf32> -> vector<8x2xf32>
    %cst_54 = arith.constant 9.765625E-4 : f32
    %152 = vector.broadcast %cst_54 : f32 to vector<8x2xf32>
    %153 = arith.mulf %151, %152 : vector<8x2xf32>
    %154 = vector.extract_strided_slice %153 {offsets = [0, 0], sizes = [8, 1], strides = [1, 1]} : vector<8x2xf32> to vector<8x1xf32>
    %155 = vector.extract_strided_slice %153 {offsets = [0, 1], sizes = [8, 1], strides = [1, 1]} : vector<8x2xf32> to vector<8x1xf32>
    %156 = arith.mulf %154, %154 : vector<8x1xf32>
    %157 = arith.subf %155, %156 : vector<8x1xf32>
    %cst_55 = arith.constant 0.000000e+00 : f32
    %158 = vector.broadcast %cst_55 : f32 to vector<8x1xf32>
    %159 = arith.maximumf %157, %158 : vector<8x1xf32>
    %160 = vector.broadcast %154 : vector<8x1xf32> to vector<8x384xf32>
    %161 = arith.subf %142, %160 : vector<8x384xf32>
    %cst_56 = arith.constant 9.99999974E-6 : f32
    %162 = vector.broadcast %cst_56 : f32 to vector<8x1xf32>
    %163 = arith.addf %159, %162 : vector<8x1xf32>
    %164 = math.rsqrt %163 : vector<8x1xf32>
    %165 = vector.broadcast %164 : vector<8x1xf32> to vector<8x384xf32>
    %166 = arith.mulf %161, %165 : vector<8x384xf32>
    %167 = vector.broadcast %139 : vector<8x1xf32> to vector<8x384xf32>
    %168 = arith.mulf %166, %167 : vector<8x384xf32>
    %169 = vector.broadcast %140 : vector<8x1xf32> to vector<8x384xf32>
    %170 = arith.addf %168, %169 : vector<8x384xf32>
    %cst_57 = arith.constant 0.000000e+00 : f32
    %171 = vector.broadcast %cst_57 : f32 to vector<8x384xf32>
    %172 = arith.cmpf oge, %170, %171 : vector<8x384xf32>
    %cst_58 = arith.constant 0.00999999977 : f32
    %173 = vector.broadcast %cst_58 : f32 to vector<8x384xf32>
    %174 = arith.mulf %173, %170 : vector<8x384xf32>
    %175 = arith.select %172, %170, %174 : vector<8x384xi1>, vector<8x384xf32>
    %176 = vector.broadcast %0 : vector<1x384xf32> to vector<8x384xf32>
    %177 = arith.mulf %175, %176 : vector<8x384xf32>
    %cst_59 = arith.constant 0.000000e+00 : f32
    %178 = vector.broadcast %cst_59 : f32 to vector<8x434xf32>
    %c0_60 = arith.constant 0 : index
    %c0_61 = arith.constant 0 : index
    %179 = vector.load %arg14[%c0_60, %c0_61] : memref<8x434xf32, #tpu.memory_space<vmem>>, vector<8x434xf32>
    tpu.vector_store %arg14[%c0_60, %c0_61], %178 {strides = array<i32>} : memref<8x434xf32, #tpu.memory_space<vmem>>, vector<8x434xf32>,
    %c0_62 = arith.constant 0 : index
    %c25_63 = arith.constant 25 : index
    %180 = vector.load %arg14[%c0_62, %c25_63] : memref<8x434xf32, #tpu.memory_space<vmem>>, vector<8x384xf32>
    tpu.vector_store %arg14[%c0_62, %c25_63], %177 {strides = array<i32>} : memref<8x434xf32, #tpu.memory_space<vmem>>, vector<8x384xf32>,
    %c0_64 = arith.constant 0 : index
    %c0_65 = arith.constant 0 : index
    %181 = vector.load %arg7[%c0_64, %c0_65] : memref<8x72xbf16, #tpu.memory_space<vmem>>, vector<8x72xbf16>
    %c0_66 = arith.constant 0 : index
    %c0_67 = arith.constant 0 : index
    %182 = vector.load %arg14[%c0_66, %c0_67] : memref<8x434xf32, #tpu.memory_space<vmem>>, vector<8x434xf32>
    %183 = vector.extract_strided_slice %182 {offsets = [0, 0], sizes = [8, 384], strides = [1, 1]} : vector<8x434xf32> to vector<8x384xf32>
    %184 = vector.extract_strided_slice %182 {offsets = [0, 1], sizes = [8, 384], strides = [1, 1]} : vector<8x434xf32> to vector<8x384xf32>
    %185 = vector.extract_strided_slice %182 {offsets = [0, 2], sizes = [8, 384], strides = [1, 1]} : vector<8x434xf32> to vector<8x384xf32>
    %186 = vector.extract_strided_slice %182 {offsets = [0, 24], sizes = [8, 384], strides = [1, 1]} : vector<8x434xf32> to vector<8x384xf32>
    %187 = vector.extract_strided_slice %182 {offsets = [0, 25], sizes = [8, 384], strides = [1, 1]} : vector<8x434xf32> to vector<8x384xf32>
    %188 = vector.extract_strided_slice %182 {offsets = [0, 26], sizes = [8, 384], strides = [1, 1]} : vector<8x434xf32> to vector<8x384xf32>
    %189 = vector.extract_strided_slice %182 {offsets = [0, 48], sizes = [8, 384], strides = [1, 1]} : vector<8x434xf32> to vector<8x384xf32>
    %190 = vector.extract_strided_slice %182 {offsets = [0, 49], sizes = [8, 384], strides = [1, 1]} : vector<8x434xf32> to vector<8x384xf32>
    %191 = vector.extract_strided_slice %182 {offsets = [0, 50], sizes = [8, 384], strides = [1, 1]} : vector<8x434xf32> to vector<8x384xf32>
    %192 = tpu.concatenate %183, %184, %185, %186, %187, %188, %189, %190, %191 in 0 : vector<8x384xf32>, vector<8x384xf32>, vector<8x384xf32>, vector<8x384xf32>, vector<8x384xf32>, vector<8x384xf32>, vector<8x384xf32>, vector<8x384xf32>, vector<8x384xf32> -> vector<72x384xf32>
    %193 = arith.truncf %192 : vector<72x384xf32> to vector<72x384xbf16>
    %cst_68 = arith.constant dense<0.000000e+00> : vector<8x384xf32>
    %194 = tpu.matmul %181, %193, %cst_68 {dimension_numbers = #tpu.dot_dimension_numbers<[1], [0], [0], [1], [0, 0, 1, 1], [], []>} : vector<8x72xbf16>, vector<72x384xbf16>, vector<8x384xf32> -> vector<8x384xf32>
    %195 = vector.extract_strided_slice %2 {offsets = [0, 9], sizes = [8, 1], strides = [1, 1]} : vector<8x12xf32> to vector<8x1xf32>
    %196 = vector.extract_strided_slice %2 {offsets = [0, 10], sizes = [8, 1], strides = [1, 1]} : vector<8x12xf32> to vector<8x1xf32>
    %197 = vector.extract_strided_slice %2 {offsets = [0, 11], sizes = [8, 1], strides = [1, 1]} : vector<8x12xf32> to vector<8x1xf32>
    %198 = vector.broadcast %195 : vector<8x1xf32> to vector<8x384xf32>
    %199 = arith.addf %194, %198 : vector<8x384xf32>
    %200 = vector.broadcast %0 : vector<1x384xf32> to vector<8x384xf32>
    %201 = arith.mulf %199, %200 : vector<8x384xf32>
    %cst_69 = arith.constant dense<0.000000e+00> : vector<8xf32>
    %202 = vector.multi_reduction <add>, %201, %cst_69 [1] : vector<8x384xf32> to vector<8xf32>
    %203 = vector.shape_cast %202 : vector<8xf32> to vector<8x1xf32>
    %204 = arith.mulf %201, %199 : vector<8x384xf32>
    %cst_70 = arith.constant dense<0.000000e+00> : vector<8xf32>
    %205 = vector.multi_reduction <add>, %204, %cst_70 [1] : vector<8x384xf32> to vector<8xf32>
    %206 = vector.shape_cast %205 : vector<8xf32> to vector<8x1xf32>
    %207 = tpu.concatenate %203, %206 in 1 : vector<8x1xf32>, vector<8x1xf32> -> vector<8x2xf32>
    %cst_71 = arith.constant dense<0.000000e+00> : vector<8x2xf32>
    %208 = tpu.matmul %1, %207, %cst_71 {dimension_numbers = #tpu.dot_dimension_numbers<[1], [0], [0], [1], [0, 0, 1, 1], [], []>} : vector<8x8xf32>, vector<8x2xf32>, vector<8x2xf32> -> vector<8x2xf32>
    %cst_72 = arith.constant 9.765625E-4 : f32
    %209 = vector.broadcast %cst_72 : f32 to vector<8x2xf32>
    %210 = arith.mulf %208, %209 : vector<8x2xf32>
    %211 = vector.extract_strided_slice %210 {offsets = [0, 0], sizes = [8, 1], strides = [1, 1]} : vector<8x2xf32> to vector<8x1xf32>
    %212 = vector.extract_strided_slice %210 {offsets = [0, 1], sizes = [8, 1], strides = [1, 1]} : vector<8x2xf32> to vector<8x1xf32>
    %213 = arith.mulf %211, %211 : vector<8x1xf32>
    %214 = arith.subf %212, %213 : vector<8x1xf32>
    %cst_73 = arith.constant 0.000000e+00 : f32
    %215 = vector.broadcast %cst_73 : f32 to vector<8x1xf32>
    %216 = arith.maximumf %214, %215 : vector<8x1xf32>
    %217 = vector.broadcast %211 : vector<8x1xf32> to vector<8x384xf32>
    %218 = arith.subf %199, %217 : vector<8x384xf32>
    %cst_74 = arith.constant 9.99999974E-6 : f32
    %219 = vector.broadcast %cst_74 : f32 to vector<8x1xf32>
    %220 = arith.addf %216, %219 : vector<8x1xf32>
    %221 = math.rsqrt %220 : vector<8x1xf32>
    %222 = vector.broadcast %221 : vector<8x1xf32> to vector<8x384xf32>
    %223 = arith.mulf %218, %222 : vector<8x384xf32>
    %224 = vector.broadcast %196 : vector<8x1xf32> to vector<8x384xf32>
    %225 = arith.mulf %223, %224 : vector<8x384xf32>
    %226 = vector.broadcast %197 : vector<8x1xf32> to vector<8x384xf32>
    %227 = arith.addf %225, %226 : vector<8x384xf32>
    %cst_75 = arith.constant 0.000000e+00 : f32
    %228 = vector.broadcast %cst_75 : f32 to vector<8x384xf32>
    %229 = arith.cmpf oge, %227, %228 : vector<8x384xf32>
    %cst_76 = arith.constant 0.00999999977 : f32
    %230 = vector.broadcast %cst_76 : f32 to vector<8x384xf32>
    %231 = arith.mulf %230, %227 : vector<8x384xf32>
    %232 = arith.select %229, %227, %231 : vector<8x384xi1>, vector<8x384xf32>
    %233 = vector.broadcast %0 : vector<1x384xf32> to vector<8x384xf32>
    %234 = arith.mulf %232, %233 : vector<8x384xf32>
    %c0_77 = arith.constant 0 : index
    %c25_78 = arith.constant 25 : index
    %235 = vector.load %arg13[%c0_77, %c25_78] : memref<8x434xf32, #tpu.memory_space<vmem>>, vector<8x384xf32>
    %236 = arith.addf %234, %235 : vector<8x384xf32>
    %c0_79 = arith.constant 0 : index
    %c0_80 = arith.constant 0 : index
    %c0_81 = arith.constant 0 : index
    %237 = vector.load %arg11[%c0_79, %c0_80, %c0_81] : memref<1x8x384xf32, #tpu.memory_space<vmem>>, vector<1x8x384xf32>
    %238 = vector.shape_cast %237 : vector<1x8x384xf32> to vector<8x384xf32>
    %239 = vector.shape_cast %236 : vector<8x384xf32> to vector<1x8x384xf32>
    tpu.vector_store %arg11[%c0_79, %c0_80, %c0_81], %239 {strides = array<i32>} : memref<1x8x384xf32, #tpu.memory_space<vmem>>, vector<1x8x384xf32>,
    return
  }
  func.func @transform_0(%arg0: i32) -> (i32, i32, i32) {
    %c0_i32 = arith.constant 0 : i32
    %c0_i32_0 = arith.constant 0 : i32
    %c0_i32_1 = arith.constant 0 : i32
    return %arg0, %c0_i32, %c0_i32_0 : i32, i32, i32
  }
  func.func @transform_1(%arg0: i32) -> (i32, i32, i32) {
    %c0_i32 = arith.constant 0 : i32
    %c0_i32_0 = arith.constant 0 : i32
    %c0_i32_1 = arith.constant 0 : i32
    return %arg0, %c0_i32, %c0_i32_0 : i32, i32, i32
  }
  func.func @transform_2(%arg0: i32) -> (i32, i32) {
    %c0_i32 = arith.constant 0 : i32
    %c0_i32_0 = arith.constant 0 : i32
    %c0_i32_1 = arith.constant 0 : i32
    return %c0_i32, %c0_i32_0 : i32, i32
  }
  func.func @transform_3(%arg0: i32) -> (i32, i32) {
    %c0_i32 = arith.constant 0 : i32
    %c0_i32_0 = arith.constant 0 : i32
    %c0_i32_1 = arith.constant 0 : i32
    return %c0_i32, %c0_i32_0 : i32, i32
  }
  func.func @transform_4(%arg0: i32) -> (i32, i32) {
    %c0_i32 = arith.constant 0 : i32
    %c0_i32_0 = arith.constant 0 : i32
    %c0_i32_1 = arith.constant 0 : i32
    return %c0_i32, %c0_i32_0 : i32, i32
  }
  func.func @transform_5(%arg0: i32) -> (i32, i32) {
    %c0_i32 = arith.constant 0 : i32
    %c0_i32_0 = arith.constant 0 : i32
    %c0_i32_1 = arith.constant 0 : i32
    return %c0_i32, %c0_i32_0 : i32, i32
  }
  func.func @transform_6(%arg0: i32) -> (i32, i32) {
    %c0_i32 = arith.constant 0 : i32
    %c0_i32_0 = arith.constant 0 : i32
    %c0_i32_1 = arith.constant 0 : i32
    return %c0_i32, %c0_i32_0 : i32, i32
  }
  func.func @transform_7(%arg0: i32) -> (i32, i32) {
    %c0_i32 = arith.constant 0 : i32
    %c0_i32_0 = arith.constant 0 : i32
    %c0_i32_1 = arith.constant 0 : i32
    return %c0_i32, %c0_i32_0 : i32, i32
  }
  func.func @transform_8(%arg0: i32) -> (i32, i32) {
    %c0_i32 = arith.constant 0 : i32
    %c0_i32_0 = arith.constant 0 : i32
    %c0_i32_1 = arith.constant 0 : i32
    return %c0_i32, %c0_i32_0 : i32, i32
  }
  func.func @transform_9(%arg0: i32) -> (i32, i32) {
    %c0_i32 = arith.constant 0 : i32
    %c0_i32_0 = arith.constant 0 : i32
    %c0_i32_1 = arith.constant 0 : i32
    return %c0_i32, %c0_i32_0 : i32, i32
  }
  func.func @transform_10(%arg0: i32) -> (i32, i32, i32) {
    %c0_i32 = arith.constant 0 : i32
    %c0_i32_0 = arith.constant 0 : i32
    %c0_i32_1 = arith.constant 0 : i32
    return %arg0, %c0_i32, %c0_i32_0 : i32, i32, i32
  }
}

</mosaic_0001>

<llo_original>
// kernel: up_convolution_block_forward.1
$region0: #{up_convolution_block_forward.1}
  #allocation0 [shape = 'u32[]', space=smem, size = 0x4, offset = 0x4, fixed_abs, tag = 'smem constant byte address 0x4 - core index']
  #allocation1 [shape = 'u32[144,128]{1,0:T(1,128)}', space=vmem, size = 0x12000, scoped, tag = 'internal scratch']
  #allocation2 [shape = 'f32[8,434]{1,0:T(8,128)}', space=vmem, size = 0x4000, scoped, tag = 'scratch operand']
  #allocation3 [shape = 'f32[8,434]{1,0:T(8,128)}', space=vmem, size = 0x4000, scoped, tag = 'scratch operand']
  #allocation4 [shape = 'f32[8,434]{1,0:T(8,128)}', space=vmem, size = 0x4000, scoped, tag = 'scratch operand']
  %s0 = inlined_call_operand.vmem [shape: f32[2,16,64], index: 0, kind: input, shape index: {}]
  %s1 = inlined_call_operand.vmem [shape: f32[2,8,434], index: 1, kind: input, shape index: {}]
  %s2 = inlined_call_operand.vmem [shape: bf16[8,16], index: 2, kind: input, shape index: {}]
  %s3 = inlined_call_operand.vmem [shape: bf16[64,384], index: 3, kind: input, shape index: {}]
  %s4 = inlined_call_operand.vmem [shape: bf16[8,144], index: 4, kind: input, shape index: {}]
  %s5 = inlined_call_operand.vmem [shape: bf16[8,72], index: 5, kind: input, shape index: {}]
  %s6 = inlined_call_operand.vmem [shape: bf16[8,72], index: 6, kind: input, shape index: {}]
  %s7 = inlined_call_operand.vmem [shape: f32[8,12], index: 7, kind: input, shape index: {}]
  %s8 = inlined_call_operand.vmem [shape: f32[8,8], index: 8, kind: input, shape index: {}]
  %s9 = inlined_call_operand.vmem [shape: f32[1,384], index: 9, kind: input, shape index: {}]
  %s10 = inlined_call_operand.vmem [shape: f32[2,8,384], index: 10, kind: output, shape index: {}]
  %s11 = sld [smem:[#allocation0]]
  $region73: #{up_convolution_block_forward.1} parent=0
    _
  %s13 = ssub.s32 1, %s11
  %s14 = scalar_select 0, %s13, %s11
  loop: start=0, step=1, limit=4
  $region2: #{up_convolution_block_forward.1} parent=0 // loop_pre_header
    _
  $region3: #{up_convolution_block_forward.1} parent=0 // loop_header
    %s16 = sphi 0, %s20
    %p17 = scmp.ge.s32.totalorder %s16, 4
    %s26 = sphi 0, %s28
    %s29 = sphi 0, %s26
    %s30 = sphi 0, %s29
    %s46 = sphi 0, %s30
    %s52 = sphi 0, %s54
    %s55 = sphi 0, %s52
    %s56 = sphi 0, %s55
    %s72 = sphi 0, %s56
    %s76 = sphi 0, %s76
    %s78 = sphi 0, %s76
    %s79 = sphi 0, %s78
    %s93 = sphi 0, %s79
    %s97 = sphi 0, %s97
    %s99 = sphi 0, %s97
    %s100 = sphi 0, %s99
    %s114 = sphi 0, %s100
    %s118 = sphi 0, %s118
    %s120 = sphi 0, %s118
    %s121 = sphi 0, %s120
    %s135 = sphi 0, %s121
    %s139 = sphi 0, %s139
    %s141 = sphi 0, %s139
    %s142 = sphi 0, %s141
    %s156 = sphi 0, %s142
    %s160 = sphi 0, %s160
    %s162 = sphi 0, %s160
    %s163 = sphi 0, %s162
    %s177 = sphi 0, %s163
    %s181 = sphi 0, %s181
    %s183 = sphi 0, %s181
    %s184 = sphi 0, %s183
    %s198 = sphi 0, %s184
    %s202 = sphi 0, %s202
    %s204 = sphi 0, %s202
    %s205 = sphi 0, %s204
    %s219 = sphi 0, %s205
    %s223 = sphi 0, %s223
    %s225 = sphi 0, %s223
    %s226 = sphi 0, %s225
    %s240 = sphi 0, %s226
    %s246 = sphi 0, %s248
    %s249 = sphi 0, %s246
    %s250 = sphi 0, %s249
    %s266 = sphi 0, %s250
  $region4: #{up_convolution_block_forward.1} parent=0 // loop_header_branch
    %19 = sbr.rel (%p17) target = $region8
  $region5: #{up_convolution_block_forward.1} parent=0 // loop_body
    %s21 = ssub.s32 %s16, 1
    %s22 = ssub.s32 %s16, 2
    %s23 = sadd.s32 %s16, 1
    %s24 = ssub.s32 %s16, %s23
    %p25 = scmp.eq.s32.totalorder %s24, 0
    %s27 = sadd.s32 %s26, 1
    %s28 = scalar_select %p25, %s26, %s27
    %p31 = pneg %p25
    %p32 = scmp.eq.s32.totalorder %s16, 1
    %p33 = por %p31, %p32
    %p34 = scmp.ne.s32.totalorder %s26, %s29
    %p35 = scmp.eq.s32.totalorder %s16, 0
    %p36 = por %p34, %p35
    %p37 = scmp.ne.s32.totalorder %s26, %s29
    %p38 = scmp.eq.s32.totalorder %s21, 1
    %p39 = por %p37, %p38
    %p40 = scmp.ne.s32.totalorder %s29, %s30
    %p41 = scmp.eq.s32.totalorder %s21, 0
    %p42 = por %p40, %p41
    %p43 = scmp.ne.s32.totalorder %s29, %s30
    %p44 = scmp.eq.s32.totalorder %s22, 1
    %p45 = por %p43, %p44
    %p47 = scmp.ne.s32.totalorder %s30, %s46
    %p48 = scmp.eq.s32.totalorder %s22, 0
    %p49 = por %p47, %p48
    %s50 = ssub.s32 %s16, %s23
    %p51 = scmp.eq.s32.totalorder %s50, 0
    %s53 = sadd.s32 %s52, 1
    %s54 = scalar_select %p51, %s52, %s53
    %p57 = pneg %p51
    %p58 = scmp.eq.s32.totalorder %s16, 1
    %p59 = por %p57, %p58
    %p60 = scmp.ne.s32.totalorder %s52, %s55
    %p61 = scmp.eq.s32.totalorder %s16, 0
    %p62 = por %p60, %p61
    %p63 = scmp.ne.s32.totalorder %s52, %s55
    %p64 = scmp.eq.s32.totalorder %s21, 1
    %p65 = por %p63, %p64
    %p66 = scmp.ne.s32.totalorder %s55, %s56
    %p67 = scmp.eq.s32.totalorder %s21, 0
    %p68 = por %p66, %p67
    %p69 = scmp.ne.s32.totalorder %s55, %s56
    %p70 = scmp.eq.s32.totalorder %s22, 1
    %p71 = por %p69, %p70
    %p73 = scmp.ne.s32.totalorder %s56, %s72
    %p74 = scmp.eq.s32.totalorder %s22, 0
    %p75 = por %p73, %p74
    %s77 = sadd.s32 %s76, 1
    %p80 = scmp.eq.s32.totalorder %s16, 1
    %p81 = scmp.ne.s32.totalorder %s76, %s78
    %p82 = scmp.eq.s32.totalorder %s16, 0
    %p83 = por %p81, %p82
    %p84 = scmp.ne.s32.totalorder %s76, %s78
    %p85 = scmp.eq.s32.totalorder %s21, 1
    %p86 = por %p84, %p85
    %p87 = scmp.ne.s32.totalorder %s78, %s79
    %p88 = scmp.eq.s32.totalorder %s21, 0
    %p89 = por %p87, %p88
    %p90 = scmp.ne.s32.totalorder %s78, %s79
    %p91 = scmp.eq.s32.totalorder %s22, 1
    %p92 = por %p90, %p91
    %p94 = scmp.ne.s32.totalorder %s79, %s93
    %p95 = scmp.eq.s32.totalorder %s22, 0
    %p96 = por %p94, %p95
    %s98 = sadd.s32 %s97, 1
    %p101 = scmp.eq.s32.totalorder %s16, 1
    %p102 = scmp.ne.s32.totalorder %s97, %s99
    %p103 = scmp.eq.s32.totalorder %s16, 0
    %p104 = por %p102, %p103
    %p105 = scmp.ne.s32.totalorder %s97, %s99
    %p106 = scmp.eq.s32.totalorder %s21, 1
    %p107 = por %p105, %p106
    %p108 = scmp.ne.s32.totalorder %s99, %s100
    %p109 = scmp.eq.s32.totalorder %s21, 0
    %p110 = por %p108, %p109
    %p111 = scmp.ne.s32.totalorder %s99, %s100
    %p112 = scmp.eq.s32.totalorder %s22, 1
    %p113 = por %p111, %p112
    %p115 = scmp.ne.s32.totalorder %s100, %s114
    %p116 = scmp.eq.s32.totalorder %s22, 0
    %p117 = por %p115, %p116
    %s119 = sadd.s32 %s118, 1
    %p122 = scmp.eq.s32.totalorder %s16, 1
    %p123 = scmp.ne.s32.totalorder %s118, %s120
    %p124 = scmp.eq.s32.totalorder %s16, 0
    %p125 = por %p123, %p124
    %p126 = scmp.ne.s32.totalorder %s118, %s120
    %p127 = scmp.eq.s32.totalorder %s21, 1
    %p128 = por %p126, %p127
    %p129 = scmp.ne.s32.totalorder %s120, %s121
    %p130 = scmp.eq.s32.totalorder %s21, 0
    %p131 = por %p129, %p130
    %p132 = scmp.ne.s32.totalorder %s120, %s121
    %p133 = scmp.eq.s32.totalorder %s22, 1
    %p134 = por %p132, %p133
    %p136 = scmp.ne.s32.totalorder %s121, %s135
    %p137 = scmp.eq.s32.totalorder %s22, 0
    %p138 = por %p136, %p137
    %s140 = sadd.s32 %s139, 1
    %p143 = scmp.eq.s32.totalorder %s16, 1
    %p144 = scmp.ne.s32.totalorder %s139, %s141
    %p145 = scmp.eq.s32.totalorder %s16, 0
    %p146 = por %p144, %p145
    %p147 = scmp.ne.s32.totalorder %s139, %s141
    %p148 = scmp.eq.s32.totalorder %s21, 1
    %p149 = por %p147, %p148
    %p150 = scmp.ne.s32.totalorder %s141, %s142
    %p151 = scmp.eq.s32.totalorder %s21, 0
    %p152 = por %p150, %p151
    %p153 = scmp.ne.s32.totalorder %s141, %s142
    %p154 = scmp.eq.s32.totalorder %s22, 1
    %p155 = por %p153, %p154
    %p157 = scmp.ne.s32.totalorder %s142, %s156
    %p158 = scmp.eq.s32.totalorder %s22, 0
    %p159 = por %p157, %p158
    %s161 = sadd.s32 %s160, 1
    %p164 = scmp.eq.s32.totalorder %s16, 1
    %p165 = scmp.ne.s32.totalorder %s160, %s162
    %p166 = scmp.eq.s32.totalorder %s16, 0
    %p167 = por %p165, %p166
    %p168 = scmp.ne.s32.totalorder %s160, %s162
    %p169 = scmp.eq.s32.totalorder %s21, 1
    %p170 = por %p168, %p169
    %p171 = scmp.ne.s32.totalorder %s162, %s163
    %p172 = scmp.eq.s32.totalorder %s21, 0
    %p173 = por %p171, %p172
    %p174 = scmp.ne.s32.totalorder %s162, %s163
    %p175 = scmp.eq.s32.totalorder %s22, 1
    %p176 = por %p174, %p175
    %p178 = scmp.ne.s32.totalorder %s163, %s177
    %p179 = scmp.eq.s32.totalorder %s22, 0
    %p180 = por %p178, %p179
    %s182 = sadd.s32 %s181, 1
    %p185 = scmp.eq.s32.totalorder %s16, 1
    %p186 = scmp.ne.s32.totalorder %s181, %s183
    %p187 = scmp.eq.s32.totalorder %s16, 0
    %p188 = por %p186, %p187
    %p189 = scmp.ne.s32.totalorder %s181, %s183
    %p190 = scmp.eq.s32.totalorder %s21, 1
    %p191 = por %p189, %p190
    %p192 = scmp.ne.s32.totalorder %s183, %s184
    %p193 = scmp.eq.s32.totalorder %s21, 0
    %p194 = por %p192, %p193
    %p195 = scmp.ne.s32.totalorder %s183, %s184
    %p196 = scmp.eq.s32.totalorder %s22, 1
    %p197 = por %p195, %p196
    %p199 = scmp.ne.s32.totalorder %s184, %s198
    %p200 = scmp.eq.s32.totalorder %s22, 0
    %p201 = por %p199, %p200
    %s203 = sadd.s32 %s202, 1
    %p206 = scmp.eq.s32.totalorder %s16, 1
    %p207 = scmp.ne.s32.totalorder %s202, %s204
    %p208 = scmp.eq.s32.totalorder %s16, 0
    %p209 = por %p207, %p208
    %p210 = scmp.ne.s32.totalorder %s202, %s204
    %p211 = scmp.eq.s32.totalorder %s21, 1
    %p212 = por %p210, %p211
    %p213 = scmp.ne.s32.totalorder %s204, %s205
    %p214 = scmp.eq.s32.totalorder %s21, 0
    %p215 = por %p213, %p214
    %p216 = scmp.ne.s32.totalorder %s204, %s205
    %p217 = scmp.eq.s32.totalorder %s22, 1
    %p218 = por %p216, %p217
    %p220 = scmp.ne.s32.totalorder %s205, %s219
    %p221 = scmp.eq.s32.totalorder %s22, 0
    %p222 = por %p220, %p221
    %s224 = sadd.s32 %s223, 1
    %p227 = scmp.eq.s32.totalorder %s16, 1
    %p228 = scmp.ne.s32.totalorder %s223, %s225
    %p229 = scmp.eq.s32.totalorder %s16, 0
    %p230 = por %p228, %p229
    %p231 = scmp.ne.s32.totalorder %s223, %s225
    %p232 = scmp.eq.s32.totalorder %s21, 1
    %p233 = por %p231, %p232
    %p234 = scmp.ne.s32.totalorder %s225, %s226
    %p235 = scmp.eq.s32.totalorder %s21, 0
    %p236 = por %p234, %p235
    %p237 = scmp.ne.s32.totalorder %s225, %s226
    %p238 = scmp.eq.s32.totalorder %s22, 1
    %p239 = por %p237, %p238
    %p241 = scmp.ne.s32.totalorder %s226, %s240
    %p242 = scmp.eq.s32.totalorder %s22, 0
    %p243 = por %p241, %p242
    %s244 = ssub.s32 %s16, %s23
    %p245 = scmp.eq.s32.totalorder %s244, 0
    %s247 = sadd.s32 %s246, 1
    %s248 = scalar_select %p245, %s246, %s247
    %p251 = pneg %p245
    %p252 = scmp.eq.s32.totalorder %s16, 1
    %p253 = por %p251, %p252
    %p254 = scmp.ne.s32.totalorder %s246, %s249
    %p255 = scmp.eq.s32.totalorder %s16, 0
    %p256 = por %p254, %p255
    %p257 = scmp.ne.s32.totalorder %s246, %s249
    %p258 = scmp.eq.s32.totalorder %s21, 1
    %p259 = por %p257, %p258
    %p260 = scmp.ne.s32.totalorder %s249, %s250
    %p261 = scmp.eq.s32.totalorder %s21, 0
    %p262 = por %p260, %p261
    %p263 = scmp.ne.s32.totalorder %s249, %s250
    %p264 = scmp.eq.s32.totalorder %s22, 1
    %p265 = por %p263, %p264
    %p267 = scmp.ne.s32.totalorder %s250, %s266
    %p268 = scmp.eq.s32.totalorder %s22, 0
    %p269 = por %p267, %p268
    %p270 = scmp.le.s32.totalorder 1, %s16
    %p271 = scmp.lt.s32.totalorder %s16, 3
    %p272 = pnand %p270, %p271
    %p273 = pneg %p272
    // Predicated region
    $region9: #{up_convolution_block_forward.1} parent=5 // pred_check
      _
    $region10: #{up_convolution_block_forward.1} parent=5 // pred_check_branch
      %275 = sbr.rel (%p272) target = $region12
    $region11: #{up_convolution_block_forward.1} parent=5 // pred_region
      %s276 = ssub.s32 %s16, 1
      // Predicated region
      $region13: #{up_convolution_block_forward.1} parent=11 // pred_check
        %p277 = pneg %p89
      $region14: #{up_convolution_block_forward.1} parent=11 // pred_check_branch
        %279 = sbr.rel (%p277) target = $region16
      $region15: #{up_convolution_block_forward.1} parent=11 // pred_region
        _
      $region16: #{up_convolution_block_forward.1} parent=11 // pred_fallthru
        _
      // Predicated region
      $region17: #{up_convolution_block_forward.1} parent=11 // pred_check
        %p280 = pneg %p110
      $region18: #{up_convolution_block_forward.1} parent=11 // pred_check_branch
        %282 = sbr.rel (%p280) target = $region20
      $region19: #{up_convolution_block_forward.1} parent=11 // pred_region
        _
      $region20: #{up_convolution_block_forward.1} parent=11 // pred_fallthru
        _
      // Predicated region
      $region21: #{up_convolution_block_forward.1} parent=11 // pred_check
        %p283 = pneg %p131
      $region22: #{up_convolution_block_forward.1} parent=11 // pred_check_branch
        %285 = sbr.rel (%p283) target = $region24
      $region23: #{up_convolution_block_forward.1} parent=11 // pred_region
        _
      $region24: #{up_convolution_block_forward.1} parent=11 // pred_fallthru
        _
      // Predicated region
      $region25: #{up_convolution_block_forward.1} parent=11 // pred_check
        %p286 = pneg %p152
      $region26: #{up_convolution_block_forward.1} parent=11 // pred_check_branch
        %288 = sbr.rel (%p286) target = $region28
      $region27: #{up_convolution_block_forward.1} parent=11 // pred_region
        _
      $region28: #{up_convolution_block_forward.1} parent=11 // pred_fallthru
        _
      // Predicated region
      $region29: #{up_convolution_block_forward.1} parent=11 // pred_check
        %p289 = pneg %p173
      $region30: #{up_convolution_block_forward.1} parent=11 // pred_check_branch
        %291 = sbr.rel (%p289) target = $region32
      $region31: #{up_convolution_block_forward.1} parent=11 // pred_region
        _
      $region32: #{up_convolution_block_forward.1} parent=11 // pred_fallthru
        _
      // Predicated region
      $region33: #{up_convolution_block_forward.1} parent=11 // pred_check
        %p292 = pneg %p194
      $region34: #{up_convolution_block_forward.1} parent=11 // pred_check_branch
        %294 = sbr.rel (%p292) target = $region36
      $region35: #{up_convolution_block_forward.1} parent=11 // pred_region
        _
      $region36: #{up_convolution_block_forward.1} parent=11 // pred_fallthru
        _
      // Predicated region
      $region37: #{up_convolution_block_forward.1} parent=11 // pred_check
        %p295 = pneg %p215
      $region38: #{up_convolution_block_forward.1} parent=11 // pred_check_branch
        %297 = sbr.rel (%p295) target = $region40
      $region39: #{up_convolution_block_forward.1} parent=11 // pred_region
        _
      $region40: #{up_convolution_block_forward.1} parent=11 // pred_fallthru
        _
      // Predicated region
      $region41: #{up_convolution_block_forward.1} parent=11 // pred_check
        %p298 = pneg %p236
      $region42: #{up_convolution_block_forward.1} parent=11 // pred_check_branch
        %300 = sbr.rel (%p298) target = $region44
      $region43: #{up_convolution_block_forward.1} parent=11 // pred_region
        _
      $region44: #{up_convolution_block_forward.1} parent=11 // pred_fallthru
        _
    $region12: #{up_convolution_block_forward.1} parent=5 // pred_fallthru
      _
    %p301 = scmp.lt.s32.totalorder %s16, 2
    // Predicated region
    $region45: #{up_convolution_block_forward.1} parent=5 // pred_check
      %p302 = pneg %p301
    $region46: #{up_convolution_block_forward.1} parent=5 // pred_check_branch
      %304 = sbr.rel (%p302) target = $region48
    $region47: #{up_convolution_block_forward.1} parent=5 // pred_region
      // Predicated region
      $region49: #{up_convolution_block_forward.1} parent=47 // pred_check
        %p305 = pneg %p36
      $region50: #{up_convolution_block_forward.1} parent=47 // pred_check_branch
        %307 = sbr.rel (%p305) target = $region52
      $region51: #{up_convolution_block_forward.1} parent=47 // pred_region
        %p308 = scmp.lt.s32.totalorder %s16, 1
        %s309 = scalar_select %p308, %s16, 1
        %s310 = smul.addr %s309, 2
        %s311 = smul.addr %s310, 8
        %s312 = scalar_lea.vmem %s0, %s311
      $region52: #{up_convolution_block_forward.1} parent=47 // pred_fallthru
        _
      // Predicated region
      $region53: #{up_convolution_block_forward.1} parent=47 // pred_check
        %p313 = pneg %p62
      $region54: #{up_convolution_block_forward.1} parent=47 // pred_check_branch
        %315 = sbr.rel (%p313) target = $region56
      $region55: #{up_convolution_block_forward.1} parent=47 // pred_region
        %p316 = scmp.lt.s32.totalorder %s16, 1
        %s317 = scalar_select %p316, %s16, 1
        %s318 = smul.addr %s317, 4
        %s319 = smul.addr %s318, 8
        %s320 = scalar_lea.vmem %s1, %s319
      $region56: #{up_convolution_block_forward.1} parent=47 // pred_fallthru
        _
    $region48: #{up_convolution_block_forward.1} parent=5 // pred_fallthru
      _
    %p321 = scmp.le.s32.totalorder 1, %s16
    %p322 = scmp.lt.s32.totalorder %s16, 3
    %p323 = pnand %p321, %p322
    %p324 = pneg %p323
    // Predicated region
    $region57: #{up_convolution_block_forward.1} parent=5 // pred_check
      _
    $region58: #{up_convolution_block_forward.1} parent=5 // pred_check_branch
      %326 = sbr.rel (%p323) target = $region60
    $region59: #{up_convolution_block_forward.1} parent=5 // pred_region
      %s327 = ssub.s32 %s16, 1
      %p328 = scmp.lt.s32.totalorder %s21, 1
      %s329 = scalar_select %p328, %s21, 1
      %s330 = smul.addr %s329, 2
      %s331 = smul.addr %s330, 8
      %s332 = scalar_lea.vmem %s0, %s331
      %p333 = pneg %p42
      %p334 = pneg %p39
      %p335 = scmp.lt.s32.totalorder %s21, 1
      %s336 = scalar_select %p335, %s21, 1
      %s337 = smul.addr %s336, 4
      %s338 = smul.addr %s337, 8
      %s339 = scalar_lea.vmem %s1, %s338
      %p340 = pneg %p68
      %p341 = pneg %p65
      %p342 = pneg %p89
      %p343 = pneg %p86
      %p344 = pneg %p110
      %p345 = pneg %p107
      %p346 = pneg %p131
      %p347 = pneg %p128
      %p348 = pneg %p152
      %p349 = pneg %p149
      %p350 = pneg %p173
      %p351 = pneg %p170
      %p352 = pneg %p194
      %p353 = pneg %p191
      %p354 = pneg %p215
      %p355 = pneg %p212
      %p356 = pneg %p236
      %p357 = pneg %p233
      %p358 = pneg %p262
      %p359 = pneg %p259
      %p360 = scmp.lt.s32.totalorder %s21, 1
      %s361 = scalar_select %p360, %s21, 1
      %s362 = smul.addr %s361, 3
      %s363 = smul.addr %s362, 8
      %s364 = scalar_lea.vmem %s10, %s363
      %p365 = scmp.lt.s32.totalorder %s21, 1
      %s366 = scalar_select %p365, %s21, 1
      %s367 = smul.addr %s366, 2
      %s368 = smul.addr %s367, 8
      %s369 = scalar_lea.vmem %s0, %s368
      %p370 = scmp.lt.s32.totalorder %s21, 1
      %s371 = scalar_select %p370, %s21, 1
      %s372 = smul.addr %s371, 4
      %s373 = smul.addr %s372, 8
      %s374 = scalar_lea.vmem %s1, %s373
      %p375 = scmp.lt.s32.totalorder %s21, 1
      %s376 = scalar_select %p375, %s21, 1
      %s377 = smul.addr %s376, 3
      %s378 = smul.addr %s377, 8
      %s379 = scalar_lea.vmem %s10, %s378
      %v381 = vld [vmem:[%s9] sm:$0x7]
      %v382 = vld [vmem:[%s8] sm:$0xff]
      %v383 = vld [vmem:[%s7] sm:$0xff]
      %v384 = vld [vmem:[%s369] sm:$0xff]
      %v385 = vld [vmem:[%s369 + $0x8] sm:$0xff]
      %v386 = vpack.c.bf16 %v385, %v384
      %v387 = vld [vmem:[%s2] sm:$0xf]
      %vm388 = vcmask 130048
      %v390 = vsel %vm388, %v387, 0
      %392 = vmatprep.subr.bf16.mxu0 0
      %393 = vmatpush1.bf16.msra.mxu0 %v386
      %394 = vmatprep.subr.bf16.mxu0 0
      %395 = vmatpush1.bf16.msra.mxu0 0
      %396 = vmatprep.subr.bf16.mxu0 0
      %397 = vmatpush1.bf16.msra.mxu0 0
      %398 = vmatprep.subr.bf16.mxu0 0
      %399 = vmatpush1.bf16.msra.mxu0 0
      %400 = vmatprep.subr.bf16.mxu0 0
      %401 = vmatpush1.bf16.msra.mxu0 0
      %402 = vmatprep.subr.bf16.mxu0 0
      %403 = vmatpush1.bf16.msra.mxu0 0
      %404 = vmatprep.subr.bf16.mxu0 0
      %405 = vmatpush1.bf16.msra.mxu0 0
      %406 = vmatprep.subr.bf16.mxu0 0
      %407 = vmatpush1.bf16.msra.mxu0 0
      %408 = vmatprep.subr.bf16.mxu0 0
      %409 = vmatpush1.bf16.msra.mxu0 0
      %410 = vmatprep.subr.bf16.mxu0 0
      %411 = vmatpush1.bf16.msra.mxu0 0
      %412 = vmatprep.subr.bf16.mxu0 0
      %413 = vmatpush1.bf16.msra.mxu0 0
      %414 = vmatprep.subr.bf16.mxu0 0
      %415 = vmatpush1.bf16.msra.mxu0 0
      %416 = vmatprep.subr.bf16.mxu0 0
      %417 = vmatpush1.bf16.msra.mxu0 0
      %418 = vmatprep.subr.bf16.mxu0 0
      %419 = vmatpush1.bf16.msra.mxu0 0
      %420 = vmatprep.subr.bf16.mxu0 0
      %421 = vmatpush1.bf16.msra.mxu0 0
      %422 = vmatprep.subr.bf16.mxu0 0
      %423 = vmatpush1.bf16.msra.mxu0 0
      %424 = vmatprep.mubr.bf16.mxu0 0
      %425 = vmatmul.mubr.bf16.gmra.mrb[0].mxu0 %v390
      %v426 = vpop.f32.mrb[0].mxu0
      %v427 = vadd.f32 0.0, %v426
      %v428 = vpop.f32.mrb[0].mxu0
      %v429 = vpop.f32.mrb[0].mxu0
      %v430 = vpop.f32.mrb[0].mxu0
      %431 = vdwg.mxu0
      %v432 = vpack.c.bf16 %v427, %v427
      %v433 = vld [vmem:[%s3] sm:$0xff]
      %v434 = vld [vmem:[%s3 + $0x8] sm:$0xf]
      %v435 = vld [vmem:[%s3 + $0xc] sm:$0xff]
      %v436 = vld [vmem:[%s3 + $0x14] sm:$0xf]
      %v437 = vld [vmem:[%s3 + $0x18] sm:$0xff]
      %v438 = vld [vmem:[%s3 + $0x20] sm:$0xf]
      %v439 = vld [vmem:[%s3 + $0x24] sm:$0xff]
      %v440 = vld [vmem:[%s3 + $0x2c] sm:$0xf]
      %v441 = vld [vmem:[%s3 + $0x30] sm:$0xff]
      %v442 = vld [vmem:[%s3 + $0x38] sm:$0xf]
      %v443 = vld [vmem:[%s3 + $0x3c] sm:$0xff]
      %v444 = vld [vmem:[%s3 + $0x44] sm:$0xf]
      %v445 = vld [vmem:[%s3 + $0x48] sm:$0xff]
      %v446 = vld [vmem:[%s3 + $0x50] sm:$0xf]
      %v447 = vld [vmem:[%s3 + $0x54] sm:$0xff]
      %v448 = vld [vmem:[%s3 + $0x5c] sm:$0xf]
      %450 = vset.pattern.permute.xlu0 0
      %451 = vperm.xlu0 %450, %v383
      %v452 = vpop.permute.xlu0 %451
      %v470 = vunpack.c.l.b16 %v433
      %v471 = vunpack.c.h.b16 %v433
      %v472 = vunpack.c.l.b16 %v434
      %v473 = vunpack.c.l.b16 %v435
      %v474 = vunpack.c.h.b16 %v435
      %v475 = vunpack.c.l.b16 %v436
      %v476 = vunpack.c.l.b16 %v437
      %v477 = vunpack.c.h.b16 %v437
      %v478 = vunpack.c.l.b16 %v438
      %v479 = vunpack.c.l.b16 %v439
      %v480 = vunpack.c.h.b16 %v439
      %v481 = vunpack.c.l.b16 %v440
      %v482 = vunpack.c.l.b16 %v441
      %v483 = vunpack.c.h.b16 %v441
      %v484 = vunpack.c.l.b16 %v442
      %v485 = vunpack.c.l.b16 %v443
      %v486 = vunpack.c.h.b16 %v443
      %v487 = vunpack.c.l.b16 %v444
      %v488 = vunpack.c.l.b16 %v445
      %v489 = vunpack.c.h.b16 %v445
      %v490 = vunpack.c.l.b16 %v446
      %v491 = vunpack.c.l.b16 %v447
      %v492 = vunpack.c.h.b16 %v447
      %v493 = vunpack.c.l.b16 %v448
      %v494 = vpack.c.b16 %v473, %v470
      %v495 = vpack.c.b16 %v474, %v471
      %v496 = vpack.c.b16 %v475, %v472
      %v497 = vpack.c.b16 %v479, %v476
      %v498 = vpack.c.b16 %v480, %v477
      %v499 = vpack.c.b16 %v481, %v478
      %v500 = vpack.c.b16 %v485, %v482
      %v501 = vpack.c.b16 %v486, %v483
      %v502 = vpack.c.b16 %v487, %v484
      %v503 = vpack.c.b16 %v491, %v488
      %v504 = vpack.c.b16 %v492, %v489
      %v505 = vpack.c.b16 %v493, %v490
      %vm518 = vcmask 523264
      %v520 = vsel %vm518, %v432, 0
      %522 = vmatprep.subr.bf16.mxu0 %v495
      %523 = vmatpush1.bf16.msra.mxu0 %v494
      %524 = vmatprep.subr.bf16.mxu0 %v498
      %525 = vmatpush1.bf16.msra.mxu0 %v497
      %526 = vmatprep.subr.bf16.mxu0 %v501
      %527 = vmatpush1.bf16.msra.mxu0 %v500
      %528 = vmatprep.subr.bf16.mxu0 %v504
      %529 = vmatpush1.bf16.msra.mxu0 %v503
      %530 = vmatprep.subr.bf16.mxu0 0
      %531 = vmatpush1.bf16.msra.mxu0 0
      %532 = vmatprep.subr.bf16.mxu0 0
      %533 = vmatpush1.bf16.msra.mxu0 0
      %534 = vmatprep.subr.bf16.mxu0 0
      %535 = vmatpush1.bf16.msra.mxu0 0
      %536 = vmatprep.subr.bf16.mxu0 0
      %537 = vmatpush1.bf16.msra.mxu0 0
      %538 = vmatprep.subr.bf16.mxu0 0
      %539 = vmatpush1.bf16.msra.mxu0 0
      %540 = vmatprep.subr.bf16.mxu0 0
      %541 = vmatpush1.bf16.msra.mxu0 0
      %542 = vmatprep.subr.bf16.mxu0 0
      %543 = vmatpush1.bf16.msra.mxu0 0
      %544 = vmatprep.subr.bf16.mxu0 0
      %545 = vmatpush1.bf16.msra.mxu0 0
      %546 = vmatprep.subr.bf16.mxu0 0
      %547 = vmatpush1.bf16.msra.mxu0 0
      %548 = vmatprep.subr.bf16.mxu0 0
      %549 = vmatpush1.bf16.msra.mxu0 0
      %550 = vmatprep.subr.bf16.mxu0 0
      %551 = vmatpush1.bf16.msra.mxu0 0
      %552 = vmatprep.subr.bf16.mxu0 0
      %553 = vmatpush1.bf16.msra.mxu0 0
      %554 = vmatprep.mubr.bf16.mxu0 0
      %555 = vmatmul.mubr.bf16.gmra.mrb[0].mxu0 %v520
      %v556 = vpop.f32.mrb[0].mxu0
      %v557 = vadd.f32 %v452, %v556
      %v558 = vpop.f32.mrb[0].mxu0
      %v559 = vadd.f32 %v452, %v558
      %v560 = vpop.f32.mrb[0].mxu0
      %v561 = vpop.f32.mrb[0].mxu0
      %562 = vdwg.mxu0
      %563 = vmatprep.subr.bf16.mxu0 0
      %564 = vmatpush1.bf16.msra.mxu0 %v496
      %565 = vmatprep.subr.bf16.mxu0 0
      %566 = vmatpush1.bf16.msra.mxu0 %v499
      %567 = vmatprep.subr.bf16.mxu0 0
      %568 = vmatpush1.bf16.msra.mxu0 %v502
      %569 = vmatprep.subr.bf16.mxu0 0
      %570 = vmatpush1.bf16.msra.mxu0 %v505
      %571 = vmatprep.subr.bf16.mxu0 0
      %572 = vmatpush1.bf16.msra.mxu0 0
      %573 = vmatprep.subr.bf16.mxu0 0
      %574 = vmatpush1.bf16.msra.mxu0 0
      %575 = vmatprep.subr.bf16.mxu0 0
      %576 = vmatpush1.bf16.msra.mxu0 0
      %577 = vmatprep.subr.bf16.mxu0 0
      %578 = vmatpush1.bf16.msra.mxu0 0
      %579 = vmatprep.subr.bf16.mxu0 0
      %580 = vmatpush1.bf16.msra.mxu0 0
      %581 = vmatprep.subr.bf16.mxu0 0
      %582 = vmatpush1.bf16.msra.mxu0 0
      %583 = vmatprep.subr.bf16.mxu0 0
      %584 = vmatpush1.bf16.msra.mxu0 0
      %585 = vmatprep.subr.bf16.mxu0 0
      %586 = vmatpush1.bf16.msra.mxu0 0
      %587 = vmatprep.subr.bf16.mxu0 0
      %588 = vmatpush1.bf16.msra.mxu0 0
      %589 = vmatprep.subr.bf16.mxu0 0
      %590 = vmatpush1.bf16.msra.mxu0 0
      %591 = vmatprep.subr.bf16.mxu0 0
      %592 = vmatpush1.bf16.msra.mxu0 0
      %593 = vmatprep.subr.bf16.mxu0 0
      %594 = vmatpush1.bf16.msra.mxu0 0
      %595 = vmatprep.mubr.bf16.mxu0 0
      %596 = vmatmul.mubr.bf16.gmra.mrb[0].mxu0 %v520
      %v597 = vpop.f32.mrb[0].mxu0
      %v598 = vadd.f32 %v452, %v597
      %v599 = vpop.f32.mrb[0].mxu0
      %v600 = vpop.f32.mrb[0].mxu0
      %v601 = vpop.f32.mrb[0].mxu0
      %602 = vdwg.mxu0
      %v604 = vlaneseq
      %v605 = vshrl.u32 %v604, 7
      %v606 = vsub.s32 0, %v605
      %v607 = vrot.slane %v381, %v606
      %v608 = vlaneseq
      %v609 = vshrl.u32 %v608, 7
      %v610 = vsub.s32 1, %v609
      %v611 = vrot.slane %v381, %v610
      %v612 = vlaneseq
      %v613 = vshrl.u32 %v612, 7
      %v614 = vsub.s32 2, %v613
      %v615 = vrot.slane %v381, %v614
      %v619 = vmul.f32 %v557, %v607
      %v620 = vmul.f32 %v559, %v611
      %v621 = vmul.f32 %v598, %v615
      %v622 = vadd.f32 %v619, %v620
      %v623 = vadd.f32 %v622, %v621
      %624 = vadd.xlane.f32.xlu0 %v623
      %v625 = vpop.xlane.xlu0 %624
      %v626 = vmul.f32 %v619, %v557
      %v627 = vmul.f32 %v620, %v559
      %v628 = vmul.f32 %v621, %v598
      %v629 = vadd.f32 %v626, %v627
      %v630 = vadd.f32 %v629, %v628
      %631 = vadd.xlane.f32.xlu0 %v630
      %v632 = vpop.xlane.xlu0 %631
      %vm633 = vcmask 7168
      %v634 = vsel %vm633, %v625, %v632
      %vm635 = vcmask 64512
      %v637 = vsel %vm635, %v382, 0
      %639 = vmatprep.subr.mxu0 0.0
      %640 = vmatpush1.msra.mxu0 %v634
      %641 = vmatprep.subr.mxu0 0.0
      %642 = vmatpush1.msra.mxu0 0.0
      %643 = vmatprep.subr.mxu0 0.0
      %644 = vmatpush1.msra.mxu0 0.0
      %645 = vmatprep.subr.mxu0 0.0
      %646 = vmatpush1.msra.mxu0 0.0
      %647 = vmatprep.subr.mxu0 0.0
      %648 = vmatpush1.msra.mxu0 0.0
      %649 = vmatprep.subr.mxu0 0.0
      %650 = vmatpush1.msra.mxu0 0.0
      %651 = vmatprep.subr.mxu0 0.0
      %652 = vmatpush1.msra.mxu0 0.0
      %653 = vmatprep.subr.mxu0 0.0
      %654 = vmatpush1.msra.mxu0 0.0
      %655 = vmatprep.subr.mxu0 0.0
      %656 = vmatpush1.msra.mxu0 0.0
      %657 = vmatprep.subr.mxu0 0.0
      %658 = vmatpush1.msra.mxu0 0.0
      %659 = vmatprep.subr.mxu0 0.0
      %660 = vmatpush1.msra.mxu0 0.0
      %661 = vmatprep.subr.mxu0 0.0
      %662 = vmatpush1.msra.mxu0 0.0
      %663 = vmatprep.subr.mxu0 0.0
      %664 = vmatpush1.msra.mxu0 0.0
      %665 = vmatprep.subr.mxu0 0.0
      %666 = vmatpush1.msra.mxu0 0.0
      %667 = vmatprep.subr.mxu0 0.0
      %668 = vmatpush1.msra.mxu0 0.0
      %669 = vmatprep.subr.mxu0 0.0
      %670 = vmatpush1.msra.mxu0 0.0
      %671 = vmatprep.subr.mxu0 0.0
      %672 = vmatpush1.msra.mxu0 0.0
      %673 = vmatprep.subr.mxu0 0.0
      %674 = vmatpush1.msra.mxu0 0.0
      %675 = vmatprep.subr.mxu0 0.0
      %676 = vmatpush1.msra.mxu0 0.0
      %677 = vmatprep.subr.mxu0 0.0
      %678 = vmatpush1.msra.mxu0 0.0
      %679 = vmatprep.subr.mxu0 0.0
      %680 = vmatpush1.msra.mxu0 0.0
      %681 = vmatprep.subr.mxu0 0.0
      %682 = vmatpush1.msra.mxu0 0.0
      %683 = vmatprep.subr.mxu0 0.0
      %684 = vmatpush1.msra.mxu0 0.0
      %685 = vmatprep.subr.mxu0 0.0
      %686 = vmatpush1.msra.mxu0 0.0
      %687 = vmatprep.subr.mxu0 0.0
      %688 = vmatpush1.msra.mxu0 0.0
      %689 = vmatprep.subr.mxu0 0.0
      %690 = vmatpush1.msra.mxu0 0.0
      %691 = vmatprep.subr.mxu0 0.0
      %692 = vmatpush1.msra.mxu0 0.0
      %693 = vmatprep.subr.mxu0 0.0
      %694 = vmatpush1.msra.mxu0 0.0
      %695 = vmatprep.subr.mxu0 0.0
      %696 = vmatpush1.msra.mxu0 0.0
      %697 = vmatprep.subr.mxu0 0.0
      %698 = vmatpush1.msra.mxu0 0.0
      %699 = vmatprep.subr.mxu0 0.0
      %700 = vmatpush1.msra.mxu0 0.0
      %701 = vmatprep.subr.mxu0 0.0
      %702 = vmatpush1.msra.mxu0 0.0
      %703 = vmatprep.mubr.f32.mxu0 0.0
      %704 = vmatmul.mubr.f32.gmra.mrb[0].mxu0 %v637
      %v705 = vpop.f32.mrb[0].mxu0
      %v706 = vadd.f32 0.0, %v705
      %v707 = vpop.f32.mrb[0].mxu0
      %708 = vdwg.mxu0
      %v709 = vmul.f32 %v706, 0.0009765625
      %v710 = vmul.f32 %v709, %v709
      %712 = vrot.lane.b32.xlu0 %v710, 1
      %v713 = vpop.permute.xlu0 %712
      %v715 = vsub.f32 %v709, %v713
      %v716 = vmax.f32 %v715, 0.0
      %718 = vset.pattern.permute.xlu0 0
      %719 = vperm.xlu0 %718, %v709
      %v720 = vpop.permute.xlu0 %719
      %v722 = vsub.f32 %v557, %v720
      %v723 = vsub.f32 %v559, %v720
      %v724 = vsub.f32 %v598, %v720
      %v725 = vadd.f32 %v716, 1e-05
      %v726 = vrsqrt.pop %v725
      %728 = vset.pattern.permute.xlu0 1
      %729 = vperm.xlu0 %728, %v726
      %v730 = vpop.permute.xlu0 %729
      %v732 = vmul.f32 %v722, %v730
      %v733 = vmul.f32 %v723, %v730
      %v734 = vmul.f32 %v724, %v730
      %735 = vset.pattern.permute.xlu0 1
      %736 = vperm.xlu0 %735, %v383
      %v737 = vpop.permute.xlu0 %736
      %v739 = vmul.f32 %v732, %v737
      %v740 = vmul.f32 %v733, %v737
      %v741 = vmul.f32 %v734, %v737
      %742 = vset.pattern.permute.xlu0 2
      %743 = vperm.xlu0 %742, %v383
      %v744 = vpop.permute.xlu0 %743
      %v746 = vadd.f32 %v739, %v744
      %v747 = vadd.f32 %v740, %v744
      %v748 = vadd.f32 %v741, %v744
      %vm749 = vcmp.ge.f32.partialorder %v746, 0.0
      %vm750 = vcmp.ge.f32.partialorder %v747, 0.0
      %vm751 = vcmp.ge.f32.partialorder %v748, 0.0
      %v752 = vmul.f32 %v746, 0.01
      %v753 = vmul.f32 %v747, 0.01
      %v754 = vmul.f32 %v748, 0.01
      %v755 = vsel %vm749, %v746, %v752
      %v756 = vsel %vm750, %v747, %v753
      %v757 = vsel %vm751, %v748, %v754
      %v758 = vmul.f32 %v755, %v607
      %v759 = vmul.f32 %v756, %v611
      %v760 = vmul.f32 %v757, %v615
      %761 = vst [vmem:[#allocation2] sm:$0xff] 0.0
      %762 = vst [vmem:[#allocation2 + $0x8] sm:$0xff] 0.0
      %763 = vst [vmem:[#allocation2 + $0x10] sm:$0xff] 0.0
      %vm764 = vcmask 408576
      %765 = vst.msk [vmem:[#allocation2 + $0x18] sm:$0xff] %vm764, 0.0
      %769 = vrot.lane.b32.xlu0 %v758, 25
      %v770 = vpop.permute.xlu0 %769
      %771 = vrot.lane.b32.xlu0 %v759, 25
      %v772 = vpop.permute.xlu0 %771
      %773 = vrot.lane.b32.xlu0 %v760, 25
      %v774 = vpop.permute.xlu0 %773
      %vm775 = vcmask 203776
      %v776 = vsel %vm775, %v770, %v772
      %v777 = vsel %vm775, %v772, %v774
      %vm782 = vcmask 1047752
      %783 = vst.msk [vmem:[#allocation2] sm:$0xff] %vm782, %v770
      %784 = vst [vmem:[#allocation2 + $0x8] sm:$0xff] %v776
      %785 = vst [vmem:[#allocation2 + $0x10] sm:$0xff] %v777
      %786 = vst.msk [vmem:[#allocation2 + $0x18] sm:$0xff] %vm775, %v774
      %v787 = vld [vmem:[%s4] sm:$0xff]
      %v788 = vld [vmem:[#allocation2] sm:$0xff]
      %v789 = vld [vmem:[#allocation2 + $0x8] sm:$0xff]
      %v790 = vld [vmem:[#allocation2 + $0x10] sm:$0xff]
      %v791 = vld [vmem:[#allocation2 + $0x18] sm:$0xff]
      %v792 = vld [vmem:[%s374] sm:$0xff]
      %v793 = vld [vmem:[%s374 + $0x8] sm:$0xff]
      %v794 = vld [vmem:[%s374 + $0x10] sm:$0xff]
      %v795 = vld [vmem:[%s374 + $0x18] sm:$0xff]
      %800 = vrot.lane.b32.xlu0 %v788, 127
      %v801 = vpop.permute.xlu0 %800
      %802 = vrot.lane.b32.xlu0 %v789, 127
      %v803 = vpop.permute.xlu0 %802
      %804 = vrot.lane.b32.xlu0 %v790, 127
      %v805 = vpop.permute.xlu0 %804
      %806 = vrot.lane.b32.xlu0 %v791, 127
      %v807 = vpop.permute.xlu0 %806
      %vm808 = vcmask 1039360
      %v809 = vsel %vm808, %v801, %v803
      %v810 = vsel %vm808, %v803, %v805
      %v811 = vsel %vm808, %v805, %v807
      %819 = vrot.lane.b32.xlu0 %v792, 127
      %v820 = vpop.permute.xlu0 %819
      %821 = vrot.lane.b32.xlu0 %v793, 127
      %v822 = vpop.permute.xlu0 %821
      %823 = vrot.lane.b32.xlu0 %v794, 127
      %v824 = vpop.permute.xlu0 %823
      %825 = vrot.lane.b32.xlu0 %v795, 127
      %v826 = vpop.permute.xlu0 %825
      %v827 = vsel %vm808, %v820, %v822
      %v828 = vsel %vm808, %v822, %v824
      %v829 = vsel %vm808, %v824, %v826
      %833 = vrot.lane.b32.xlu0 %v788, 126
      %v834 = vpop.permute.xlu0 %833
      %835 = vrot.lane.b32.xlu0 %v789, 126
      %v836 = vpop.permute.xlu0 %835
      %837 = vrot.lane.b32.xlu0 %v790, 126
      %v838 = vpop.permute.xlu0 %837
      %839 = vrot.lane.b32.xlu0 %v791, 126
      %v840 = vpop.permute.xlu0 %839
      %vm841 = vcmask 1031168
      %v842 = vsel %vm841, %v834, %v836
      %v843 = vsel %vm841, %v836, %v838
      %v844 = vsel %vm841, %v838, %v840
      %848 = vrot.lane.b32.xlu0 %v792, 126
      %v849 = vpop.permute.xlu0 %848
      %850 = vrot.lane.b32.xlu0 %v793, 126
      %v851 = vpop.permute.xlu0 %850
      %852 = vrot.lane.b32.xlu0 %v794, 126
      %v853 = vpop.permute.xlu0 %852
      %854 = vrot.lane.b32.xlu0 %v795, 126
      %v855 = vpop.permute.xlu0 %854
      %v856 = vsel %vm841, %v849, %v851
      %v857 = vsel %vm841, %v851, %v853
      %v858 = vsel %vm841, %v853, %v855
      %862 = vrot.lane.b32.xlu0 %v788, 104
      %v863 = vpop.permute.xlu0 %862
      %864 = vrot.lane.b32.xlu0 %v789, 104
      %v865 = vpop.permute.xlu0 %864
      %866 = vrot.lane.b32.xlu0 %v790, 104
      %v867 = vpop.permute.xlu0 %866
      %868 = vrot.lane.b32.xlu0 %v791, 104
      %v869 = vpop.permute.xlu0 %868
      %vm870 = vcmask 850944
      %v871 = vsel %vm870, %v863, %v865
      %v872 = vsel %vm870, %v865, %v867
      %v873 = vsel %vm870, %v867, %v869
      %877 = vrot.lane.b32.xlu0 %v792, 104
      %v878 = vpop.permute.xlu0 %877
      %879 = vrot.lane.b32.xlu0 %v793, 104
      %v880 = vpop.permute.xlu0 %879
      %881 = vrot.lane.b32.xlu0 %v794, 104
      %v882 = vpop.permute.xlu0 %881
      %883 = vrot.lane.b32.xlu0 %v795, 104
      %v884 = vpop.permute.xlu0 %883
      %v885 = vsel %vm870, %v878, %v880
      %v886 = vsel %vm870, %v880, %v882
      %v887 = vsel %vm870, %v882, %v884
      %891 = vrot.lane.b32.xlu0 %v788, 103
      %v892 = vpop.permute.xlu0 %891
      %893 = vrot.lane.b32.xlu0 %v789, 103
      %v894 = vpop.permute.xlu0 %893
      %895 = vrot.lane.b32.xlu0 %v790, 103
      %v896 = vpop.permute.xlu0 %895
      %897 = vrot.lane.b32.xlu0 %v791, 103
      %v898 = vpop.permute.xlu0 %897
      %vm899 = vcmask 842752
      %v900 = vsel %vm899, %v892, %v894
      %v901 = vsel %vm899, %v894, %v896
      %v902 = vsel %vm899, %v896, %v898
      %906 = vrot.lane.b32.xlu0 %v792, 103
      %v907 = vpop.permute.xlu0 %906
      %908 = vrot.lane.b32.xlu0 %v793, 103
      %v909 = vpop.permute.xlu0 %908
      %910 = vrot.lane.b32.xlu0 %v794, 103
      %v911 = vpop.permute.xlu0 %910
      %912 = vrot.lane.b32.xlu0 %v795, 103
      %v913 = vpop.permute.xlu0 %912
      %v914 = vsel %vm899, %v907, %v909
      %v915 = vsel %vm899, %v909, %v911
      %v916 = vsel %vm899, %v911, %v913
      %920 = vrot.lane.b32.xlu0 %v788, 102
      %v921 = vpop.permute.xlu0 %920
      %922 = vrot.lane.b32.xlu0 %v789, 102
      %v923 = vpop.permute.xlu0 %922
      %924 = vrot.lane.b32.xlu0 %v790, 102
      %v925 = vpop.permute.xlu0 %924
      %926 = vrot.lane.b32.xlu0 %v791, 102
      %v927 = vpop.permute.xlu0 %926
      %vm928 = vcmask 834560
      %v929 = vsel %vm928, %v921, %v923
      %v930 = vsel %vm928, %v923, %v925
      %v931 = vsel %vm928, %v925, %v927
      %935 = vrot.lane.b32.xlu0 %v792, 102
      %v936 = vpop.permute.xlu0 %935
      %937 = vrot.lane.b32.xlu0 %v793, 102
      %v938 = vpop.permute.xlu0 %937
      %939 = vrot.lane.b32.xlu0 %v794, 102
      %v940 = vpop.permute.xlu0 %939
      %941 = vrot.lane.b32.xlu0 %v795, 102
      %v942 = vpop.permute.xlu0 %941
      %v943 = vsel %vm928, %v936, %v938
      %v944 = vsel %vm928, %v938, %v940
      %v945 = vsel %vm928, %v940, %v942
      %949 = vrot.lane.b32.xlu0 %v788, 80
      %v950 = vpop.permute.xlu0 %949
      %951 = vrot.lane.b32.xlu0 %v789, 80
      %v952 = vpop.permute.xlu0 %951
      %953 = vrot.lane.b32.xlu0 %v790, 80
      %v954 = vpop.permute.xlu0 %953
      %955 = vrot.lane.b32.xlu0 %v791, 80
      %v956 = vpop.permute.xlu0 %955
      %vm957 = vcmask 654336
      %v958 = vsel %vm957, %v950, %v952
      %v959 = vsel %vm957, %v952, %v954
      %v960 = vsel %vm957, %v954, %v956
      %964 = vrot.lane.b32.xlu0 %v792, 80
      %v965 = vpop.permute.xlu0 %964
      %966 = vrot.lane.b32.xlu0 %v793, 80
      %v967 = vpop.permute.xlu0 %966
      %968 = vrot.lane.b32.xlu0 %v794, 80
      %v969 = vpop.permute.xlu0 %968
      %970 = vrot.lane.b32.xlu0 %v795, 80
      %v971 = vpop.permute.xlu0 %970
      %v972 = vsel %vm957, %v965, %v967
      %v973 = vsel %vm957, %v967, %v969
      %v974 = vsel %vm957, %v969, %v971
      %978 = vrot.lane.b32.xlu0 %v788, 79
      %v979 = vpop.permute.xlu0 %978
      %980 = vrot.lane.b32.xlu0 %v789, 79
      %v981 = vpop.permute.xlu0 %980
      %982 = vrot.lane.b32.xlu0 %v790, 79
      %v983 = vpop.permute.xlu0 %982
      %984 = vrot.lane.b32.xlu0 %v791, 79
      %v985 = vpop.permute.xlu0 %984
      %vm986 = vcmask 646144
      %v987 = vsel %vm986, %v979, %v981
      %v988 = vsel %vm986, %v981, %v983
      %v989 = vsel %vm986, %v983, %v985
      %993 = vrot.lane.b32.xlu0 %v792, 79
      %v994 = vpop.permute.xlu0 %993
      %995 = vrot.lane.b32.xlu0 %v793, 79
      %v996 = vpop.permute.xlu0 %995
      %997 = vrot.lane.b32.xlu0 %v794, 79
      %v998 = vpop.permute.xlu0 %997
      %999 = vrot.lane.b32.xlu0 %v795, 79
      %v1000 = vpop.permute.xlu0 %999
      %v1001 = vsel %vm986, %v994, %v996
      %v1002 = vsel %vm986, %v996, %v998
      %v1003 = vsel %vm986, %v998, %v1000
      %1007 = vrot.lane.b32.xlu0 %v788, 78
      %v1008 = vpop.permute.xlu0 %1007
      %1009 = vrot.lane.b32.xlu0 %v789, 78
      %v1010 = vpop.permute.xlu0 %1009
      %1011 = vrot.lane.b32.xlu0 %v790, 78
      %v1012 = vpop.permute.xlu0 %1011
      %1013 = vrot.lane.b32.xlu0 %v791, 78
      %v1014 = vpop.permute.xlu0 %1013
      %1015 = vrot.lane.b32.xlu0 %v792, 78
      %v1016 = vpop.permute.xlu0 %1015
      %1017 = vrot.lane.b32.xlu0 %v793, 78
      %v1018 = vpop.permute.xlu0 %1017
      %1019 = vrot.lane.b32.xlu0 %v794, 78
      %v1020 = vpop.permute.xlu0 %1019
      %1021 = vrot.lane.b32.xlu0 %v795, 78
      %v1022 = vpop.permute.xlu0 %1021
      %vm1023 = vcmask 637952
      %v1024 = vsel %vm1023, %v1008, %v1010
      %v1025 = vsel %vm1023, %v1010, %v1012
      %v1026 = vsel %vm1023, %v1012, %v1014
      %v1027 = vsel %vm1023, %v1016, %v1018
      %v1028 = vsel %vm1023, %v1018, %v1020
      %v1029 = vsel %vm1023, %v1020, %v1022
      %v1036 = vpack.c.bf16 %v792, %v788
      %v1037 = vpack.c.bf16 %v793, %v789
      %v1038 = vpack.c.bf16 %v794, %v790
      %v1039 = vpack.c.bf16 %v827, %v809
      %v1040 = vpack.c.bf16 %v828, %v810
      %v1041 = vpack.c.bf16 %v829, %v811
      %v1042 = vpack.c.bf16 %v856, %v842
      %v1043 = vpack.c.bf16 %v857, %v843
      %v1044 = vpack.c.bf16 %v858, %v844
      %v1045 = vpack.c.bf16 %v885, %v871
      %v1046 = vpack.c.bf16 %v886, %v872
      %v1047 = vpack.c.bf16 %v887, %v873
      %v1048 = vpack.c.bf16 %v914, %v900
      %v1049 = vpack.c.bf16 %v915, %v901
      %v1050 = vpack.c.bf16 %v916, %v902
      %v1051 = vpack.c.bf16 %v943, %v929
      %v1052 = vpack.c.bf16 %v944, %v930
      %v1053 = vpack.c.bf16 %v945, %v931
      %v1054 = vpack.c.bf16 %v972, %v958
      %v1055 = vpack.c.bf16 %v973, %v959
      %v1056 = vpack.c.bf16 %v974, %v960
      %v1057 = vpack.c.bf16 %v1001, %v987
      %v1058 = vpack.c.bf16 %v1002, %v988
      %v1059 = vpack.c.bf16 %v1003, %v989
      %v1060 = vpack.c.bf16 %v1027, %v1024
      %v1061 = vpack.c.bf16 %v1028, %v1025
      %v1062 = vpack.c.bf16 %v1029, %v1026
      %1063 = vset.pattern.permute.xlu0 3
      %1064 = vperm.xlu0 %1063, %v383
      %v1065 = vpop.permute.xlu0 %1064
      %v1068 = vunpack.c.l.b16 %v787
      %v1069 = vunpack.c.h.b16 %v787
      %v1070 = vpack.c.b16 %v1068, %v1068
      %v1071 = vpack.c.b16 %v1069, %v1069
      %v1074 = vsel %vm388, %v1071, 0
      %1076 = vmatprep.subr.bf16.mxu0 %v1037
      %1077 = vmatpush1.bf16.msra.mxu0 %v1036
      %1078 = vmatprep.subr.bf16.mxu0 %v1040
      %1079 = vmatpush1.bf16.msra.mxu0 %v1039
      %1080 = vmatprep.subr.bf16.mxu0 %v1043
      %1081 = vmatpush1.bf16.msra.mxu0 %v1042
      %1082 = vmatprep.subr.bf16.mxu0 %v1046
      %1083 = vmatpush1.bf16.msra.mxu0 %v1045
      %1084 = vmatprep.subr.bf16.mxu0 %v1049
      %1085 = vmatpush1.bf16.msra.mxu0 %v1048
      %1086 = vmatprep.subr.bf16.mxu0 %v1052
      %1087 = vmatpush1.bf16.msra.mxu0 %v1051
      %1088 = vmatprep.subr.bf16.mxu0 %v1055
      %1089 = vmatpush1.bf16.msra.mxu0 %v1054
      %1090 = vmatprep.subr.bf16.mxu0 %v1058
      %1091 = vmatpush1.bf16.msra.mxu0 %v1057
      %1092 = vmatprep.subr.bf16.mxu0 %v1061
      %1093 = vmatpush1.bf16.msra.mxu0 %v1060
      %1094 = vmatprep.subr.bf16.mxu0 0
      %1095 = vmatpush1.bf16.msra.mxu0 0
      %1096 = vmatprep.subr.bf16.mxu0 0
      %1097 = vmatpush1.bf16.msra.mxu0 0
      %1098 = vmatprep.subr.bf16.mxu0 0
      %1099 = vmatpush1.bf16.msra.mxu0 0
      %1100 = vmatprep.subr.bf16.mxu0 0
      %1101 = vmatpush1.bf16.msra.mxu0 0
      %1102 = vmatprep.subr.bf16.mxu0 0
      %1103 = vmatpush1.bf16.msra.mxu0 0
      %1104 = vmatprep.subr.bf16.mxu0 0
      %1105 = vmatpush1.bf16.msra.mxu0 0
      %1106 = vmatprep.subr.bf16.mxu0 0
      %1107 = vmatpush1.bf16.msra.mxu0 0
      %1108 = vmatprep.mubr.bf16.mxu0 %v1074
      %1109 = vmatmul.mubr.bf16.gmra.mrb[0].mxu0 %v1070
      %v1110 = vpop.f32.mrb[0].mxu0
      %v1111 = vadd.f32 %v1065, %v1110
      %v1112 = vpop.f32.mrb[0].mxu0
      %v1113 = vadd.f32 %v1065, %v1112
      %v1114 = vpop.f32.mrb[0].mxu0
      %v1115 = vpop.f32.mrb[0].mxu0
      %1116 = vdwg.mxu0
      %1117 = vmatprep.subr.bf16.mxu0 0
      %1118 = vmatpush1.bf16.msra.mxu0 %v1038
      %1119 = vmatprep.subr.bf16.mxu0 0
      %1120 = vmatpush1.bf16.msra.mxu0 %v1041
      %1121 = vmatprep.subr.bf16.mxu0 0
      %1122 = vmatpush1.bf16.msra.mxu0 %v1044
      %1123 = vmatprep.subr.bf16.mxu0 0
      %1124 = vmatpush1.bf16.msra.mxu0 %v1047
      %1125 = vmatprep.subr.bf16.mxu0 0
      %1126 = vmatpush1.bf16.msra.mxu0 %v1050
      %1127 = vmatprep.subr.bf16.mxu0 0
      %1128 = vmatpush1.bf16.msra.mxu0 %v1053
      %1129 = vmatprep.subr.bf16.mxu0 0
      %1130 = vmatpush1.bf16.msra.mxu0 %v1056
      %1131 = vmatprep.subr.bf16.mxu0 0
      %1132 = vmatpush1.bf16.msra.mxu0 %v1059
      %1133 = vmatprep.subr.bf16.mxu0 0
      %1134 = vmatpush1.bf16.msra.mxu0 %v1062
      %1135 = vmatprep.subr.bf16.mxu0 0
      %1136 = vmatpush1.bf16.msra.mxu0 0
      %1137 = vmatprep.subr.bf16.mxu0 0
      %1138 = vmatpush1.bf16.msra.mxu0 0
      %1139 = vmatprep.subr.bf16.mxu0 0
      %1140 = vmatpush1.bf16.msra.mxu0 0
      %1141 = vmatprep.subr.bf16.mxu0 0
      %1142 = vmatpush1.bf16.msra.mxu0 0
      %1143 = vmatprep.subr.bf16.mxu0 0
      %1144 = vmatpush1.bf16.msra.mxu0 0
      %1145 = vmatprep.subr.bf16.mxu0 0
      %1146 = vmatpush1.bf16.msra.mxu0 0
      %1147 = vmatprep.subr.bf16.mxu0 0
      %1148 = vmatpush1.bf16.msra.mxu0 0
      %1149 = vmatprep.mubr.bf16.mxu0 %v1074
      %1150 = vmatmul.mubr.bf16.gmra.mrb[0].mxu0 %v1070
      %v1151 = vpop.f32.mrb[0].mxu0
      %v1152 = vadd.f32 %v1065, %v1151
      %v1153 = vpop.f32.mrb[0].mxu0
      %v1154 = vpop.f32.mrb[0].mxu0
      %v1155 = vpop.f32.mrb[0].mxu0
      %1156 = vdwg.mxu0
      %v1157 = vmul.f32 %v1111, %v607
      %v1158 = vmul.f32 %v1113, %v611
      %v1159 = vmul.f32 %v1152, %v615
      %v1160 = vadd.f32 %v1157, %v1158
      %v1161 = vadd.f32 %v1160, %v1159
      %1162 = vadd.xlane.f32.xlu0 %v1161
      %v1163 = vpop.xlane.xlu0 %1162
      %v1164 = vmul.f32 %v1157, %v1111
      %v1165 = vmul.f32 %v1158, %v1113
      %v1166 = vmul.f32 %v1159, %v1152
      %v1167 = vadd.f32 %v1164, %v1165
      %v1168 = vadd.f32 %v1167, %v1166
      %1169 = vadd.xlane.f32.xlu0 %v1168
      %v1170 = vpop.xlane.xlu0 %1169
      %v1171 = vsel %vm633, %v1163, %v1170
      %1172 = vmatprep.subr.mxu0 0.0
      %1173 = vmatpush1.msra.mxu0 %v1171
      %1174 = vmatprep.subr.mxu0 0.0
      %1175 = vmatpush1.msra.mxu0 0.0
      %1176 = vmatprep.subr.mxu0 0.0
      %1177 = vmatpush1.msra.mxu0 0.0
      %1178 = vmatprep.subr.mxu0 0.0
      %1179 = vmatpush1.msra.mxu0 0.0
      %1180 = vmatprep.subr.mxu0 0.0
      %1181 = vmatpush1.msra.mxu0 0.0
      %1182 = vmatprep.subr.mxu0 0.0
      %1183 = vmatpush1.msra.mxu0 0.0
      %1184 = vmatprep.subr.mxu0 0.0
      %1185 = vmatpush1.msra.mxu0 0.0
      %1186 = vmatprep.subr.mxu0 0.0
      %1187 = vmatpush1.msra.mxu0 0.0
      %1188 = vmatprep.subr.mxu0 0.0
      %1189 = vmatpush1.msra.mxu0 0.0
      %1190 = vmatprep.subr.mxu0 0.0
      %1191 = vmatpush1.msra.mxu0 0.0
      %1192 = vmatprep.subr.mxu0 0.0
      %1193 = vmatpush1.msra.mxu0 0.0
      %1194 = vmatprep.subr.mxu0 0.0
      %1195 = vmatpush1.msra.mxu0 0.0
      %1196 = vmatprep.subr.mxu0 0.0
      %1197 = vmatpush1.msra.mxu0 0.0
      %1198 = vmatprep.subr.mxu0 0.0
      %1199 = vmatpush1.msra.mxu0 0.0
      %1200 = vmatprep.subr.mxu0 0.0
      %1201 = vmatpush1.msra.mxu0 0.0
      %1202 = vmatprep.subr.mxu0 0.0
      %1203 = vmatpush1.msra.mxu0 0.0
      %1204 = vmatprep.subr.mxu0 0.0
      %1205 = vmatpush1.msra.mxu0 0.0
      %1206 = vmatprep.subr.mxu0 0.0
      %1207 = vmatpush1.msra.mxu0 0.0
      %1208 = vmatprep.subr.mxu0 0.0
      %1209 = vmatpush1.msra.mxu0 0.0
      %1210 = vmatprep.subr.mxu0 0.0
      %1211 = vmatpush1.msra.mxu0 0.0
      %1212 = vmatprep.subr.mxu0 0.0
      %1213 = vmatpush1.msra.mxu0 0.0
      %1214 = vmatprep.subr.mxu0 0.0
      %1215 = vmatpush1.msra.mxu0 0.0
      %1216 = vmatprep.subr.mxu0 0.0
      %1217 = vmatpush1.msra.mxu0 0.0
      %1218 = vmatprep.subr.mxu0 0.0
      %1219 = vmatpush1.msra.mxu0 0.0
      %1220 = vmatprep.subr.mxu0 0.0
      %1221 = vmatpush1.msra.mxu0 0.0
      %1222 = vmatprep.subr.mxu0 0.0
      %1223 = vmatpush1.msra.mxu0 0.0
      %1224 = vmatprep.subr.mxu0 0.0
      %1225 = vmatpush1.msra.mxu0 0.0
      %1226 = vmatprep.subr.mxu0 0.0
      %1227 = vmatpush1.msra.mxu0 0.0
      %1228 = vmatprep.subr.mxu0 0.0
      %1229 = vmatpush1.msra.mxu0 0.0
      %1230 = vmatprep.subr.mxu0 0.0
      %1231 = vmatpush1.msra.mxu0 0.0
      %1232 = vmatprep.subr.mxu0 0.0
      %1233 = vmatpush1.msra.mxu0 0.0
      %1234 = vmatprep.subr.mxu0 0.0
      %1235 = vmatpush1.msra.mxu0 0.0
      %1236 = vmatprep.mubr.f32.mxu0 0.0
      %1237 = vmatmul.mubr.f32.gmra.mrb[0].mxu0 %v637
      %v1238 = vpop.f32.mrb[0].mxu0
      %v1239 = vadd.f32 0.0, %v1238
      %v1240 = vpop.f32.mrb[0].mxu0
      %1241 = vdwg.mxu0
      %v1242 = vmul.f32 %v1239, 0.0009765625
      %v1243 = vmul.f32 %v1242, %v1242
      %1245 = vrot.lane.b32.xlu0 %v1243, 1
      %v1246 = vpop.permute.xlu0 %1245
      %v1248 = vsub.f32 %v1242, %v1246
      %v1249 = vmax.f32 %v1248, 0.0
      %1251 = vset.pattern.permute.xlu0 0
      %1252 = vperm.xlu0 %1251, %v1242
      %v1253 = vpop.permute.xlu0 %1252
      %v1255 = vsub.f32 %v1111, %v1253
      %v1256 = vsub.f32 %v1113, %v1253
      %v1257 = vsub.f32 %v1152, %v1253
      %v1258 = vadd.f32 %v1249, 1e-05
      %v1259 = vrsqrt.pop %v1258
      %1261 = vset.pattern.permute.xlu0 1
      %1262 = vperm.xlu0 %1261, %v1259
      %v1263 = vpop.permute.xlu0 %1262
      %v1265 = vmul.f32 %v1255, %v1263
      %v1266 = vmul.f32 %v1256, %v1263
      %v1267 = vmul.f32 %v1257, %v1263
      %1268 = vset.pattern.permute.xlu0 4
      %1269 = vperm.xlu0 %1268, %v383
      %v1270 = vpop.permute.xlu0 %1269
      %v1272 = vmul.f32 %v1265, %v1270
      %v1273 = vmul.f32 %v1266, %v1270
      %v1274 = vmul.f32 %v1267, %v1270
      %1275 = vset.pattern.permute.xlu0 5
      %1276 = vperm.xlu0 %1275, %v383
      %v1277 = vpop.permute.xlu0 %1276
      %v1279 = vadd.f32 %v1272, %v1277
      %v1280 = vadd.f32 %v1273, %v1277
      %v1281 = vadd.f32 %v1274, %v1277
      %vm1282 = vcmp.ge.f32.partialorder %v1279, 0.0
      %vm1283 = vcmp.ge.f32.partialorder %v1280, 0.0
      %vm1284 = vcmp.ge.f32.partialorder %v1281, 0.0
      %v1285 = vmul.f32 %v1279, 0.01
      %v1286 = vmul.f32 %v1280, 0.01
      %v1287 = vmul.f32 %v1281, 0.01
      %v1288 = vsel %vm1282, %v1279, %v1285
      %v1289 = vsel %vm1283, %v1280, %v1286
      %v1290 = vsel %vm1284, %v1281, %v1287
      %v1291 = vmul.f32 %v1288, %v607
      %v1292 = vmul.f32 %v1289, %v611
      %v1293 = vmul.f32 %v1290, %v615
      %1294 = vst [vmem:[#allocation3] sm:$0xff] 0.0
      %1295 = vst [vmem:[#allocation3 + $0x8] sm:$0xff] 0.0
      %1296 = vst [vmem:[#allocation3 + $0x10] sm:$0xff] 0.0
      %1297 = vst.msk [vmem:[#allocation3 + $0x18] sm:$0xff] %vm764, 0.0
      %1301 = vrot.lane.b32.xlu0 %v1291, 25
      %v1302 = vpop.permute.xlu0 %1301
      %1303 = vrot.lane.b32.xlu0 %v1292, 25
      %v1304 = vpop.permute.xlu0 %1303
      %1305 = vrot.lane.b32.xlu0 %v1293, 25
      %v1306 = vpop.permute.xlu0 %1305
      %v1307 = vsel %vm775, %v1302, %v1304
      %v1308 = vsel %vm775, %v1304, %v1306
      %1313 = vst.msk [vmem:[#allocation3] sm:$0xff] %vm782, %v1302
      %1314 = vst [vmem:[#allocation3 + $0x8] sm:$0xff] %v1307
      %1315 = vst [vmem:[#allocation3 + $0x10] sm:$0xff] %v1308
      %1316 = vst.msk [vmem:[#allocation3 + $0x18] sm:$0xff] %vm775, %v1306
      %v1317 = vld [vmem:[%s5] sm:$0xf]
      %v1318 = vld [vmem:[#allocation3] sm:$0xff]
      %v1319 = vld [vmem:[#allocation3 + $0x8] sm:$0xff]
      %v1320 = vld [vmem:[#allocation3 + $0x10] sm:$0xff]
      %v1321 = vld [vmem:[#allocation3 + $0x18] sm:$0xff]
      %1326 = vrot.lane.b32.xlu0 %v1318, 127
      %v1327 = vpop.permute.xlu0 %1326
      %1328 = vrot.lane.b32.xlu0 %v1319, 127
      %v1329 = vpop.permute.xlu0 %1328
      %1330 = vrot.lane.b32.xlu0 %v1320, 127
      %v1331 = vpop.permute.xlu0 %1330
      %1332 = vrot.lane.b32.xlu0 %v1321, 127
      %v1333 = vpop.permute.xlu0 %1332
      %v1334 = vsel %vm808, %v1327, %v1329
      %v1335 = vsel %vm808, %v1329, %v1331
      %v1336 = vsel %vm808, %v1331, %v1333
      %1340 = vrot.lane.b32.xlu0 %v1318, 126
      %v1341 = vpop.permute.xlu0 %1340
      %1342 = vrot.lane.b32.xlu0 %v1319, 126
      %v1343 = vpop.permute.xlu0 %1342
      %1344 = vrot.lane.b32.xlu0 %v1320, 126
      %v1345 = vpop.permute.xlu0 %1344
      %1346 = vrot.lane.b32.xlu0 %v1321, 126
      %v1347 = vpop.permute.xlu0 %1346
      %v1348 = vsel %vm841, %v1341, %v1343
      %v1349 = vsel %vm841, %v1343, %v1345
      %v1350 = vsel %vm841, %v1345, %v1347
      %1354 = vrot.lane.b32.xlu0 %v1318, 104
      %v1355 = vpop.permute.xlu0 %1354
      %1356 = vrot.lane.b32.xlu0 %v1319, 104
      %v1357 = vpop.permute.xlu0 %1356
      %1358 = vrot.lane.b32.xlu0 %v1320, 104
      %v1359 = vpop.permute.xlu0 %1358
      %1360 = vrot.lane.b32.xlu0 %v1321, 104
      %v1361 = vpop.permute.xlu0 %1360
      %v1362 = vsel %vm870, %v1355, %v1357
      %v1363 = vsel %vm870, %v1357, %v1359
      %v1364 = vsel %vm870, %v1359, %v1361
      %1368 = vrot.lane.b32.xlu0 %v1318, 103
      %v1369 = vpop.permute.xlu0 %1368
      %1370 = vrot.lane.b32.xlu0 %v1319, 103
      %v1371 = vpop.permute.xlu0 %1370
      %1372 = vrot.lane.b32.xlu0 %v1320, 103
      %v1373 = vpop.permute.xlu0 %1372
      %1374 = vrot.lane.b32.xlu0 %v1321, 103
      %v1375 = vpop.permute.xlu0 %1374
      %v1376 = vsel %vm899, %v1369, %v1371
      %v1377 = vsel %vm899, %v1371, %v1373
      %v1378 = vsel %vm899, %v1373, %v1375
      %1382 = vrot.lane.b32.xlu0 %v1318, 102
      %v1383 = vpop.permute.xlu0 %1382
      %1384 = vrot.lane.b32.xlu0 %v1319, 102
      %v1385 = vpop.permute.xlu0 %1384
      %1386 = vrot.lane.b32.xlu0 %v1320, 102
      %v1387 = vpop.permute.xlu0 %1386
      %1388 = vrot.lane.b32.xlu0 %v1321, 102
      %v1389 = vpop.permute.xlu0 %1388
      %v1390 = vsel %vm928, %v1383, %v1385
      %v1391 = vsel %vm928, %v1385, %v1387
      %v1392 = vsel %vm928, %v1387, %v1389
      %1396 = vrot.lane.b32.xlu0 %v1318, 80
      %v1397 = vpop.permute.xlu0 %1396
      %1398 = vrot.lane.b32.xlu0 %v1319, 80
      %v1399 = vpop.permute.xlu0 %1398
      %1400 = vrot.lane.b32.xlu0 %v1320, 80
      %v1401 = vpop.permute.xlu0 %1400
      %1402 = vrot.lane.b32.xlu0 %v1321, 80
      %v1403 = vpop.permute.xlu0 %1402
      %v1404 = vsel %vm957, %v1397, %v1399
      %v1405 = vsel %vm957, %v1399, %v1401
      %v1406 = vsel %vm957, %v1401, %v1403
      %1410 = vrot.lane.b32.xlu0 %v1318, 79
      %v1411 = vpop.permute.xlu0 %1410
      %1412 = vrot.lane.b32.xlu0 %v1319, 79
      %v1413 = vpop.permute.xlu0 %1412
      %1414 = vrot.lane.b32.xlu0 %v1320, 79
      %v1415 = vpop.permute.xlu0 %1414
      %1416 = vrot.lane.b32.xlu0 %v1321, 79
      %v1417 = vpop.permute.xlu0 %1416
      %v1418 = vsel %vm986, %v1411, %v1413
      %v1419 = vsel %vm986, %v1413, %v1415
      %v1420 = vsel %vm986, %v1415, %v1417
      %1424 = vrot.lane.b32.xlu0 %v1318, 78
      %v1425 = vpop.permute.xlu0 %1424
      %1426 = vrot.lane.b32.xlu0 %v1319, 78
      %v1427 = vpop.permute.xlu0 %1426
      %1428 = vrot.lane.b32.xlu0 %v1320, 78
      %v1429 = vpop.permute.xlu0 %1428
      %1430 = vrot.lane.b32.xlu0 %v1321, 78
      %v1431 = vpop.permute.xlu0 %1430
      %v1432 = vsel %vm1023, %v1425, %v1427
      %v1433 = vsel %vm1023, %v1427, %v1429
      %v1434 = vsel %vm1023, %v1429, %v1431
      %v1438 = vpack.c.bf16 %v1334, %v1318
      %v1439 = vpack.c.bf16 %v1335, %v1319
      %v1440 = vpack.c.bf16 %v1336, %v1320
      %v1441 = vpack.c.bf16 %v1362, %v1348
      %v1442 = vpack.c.bf16 %v1363, %v1349
      %v1443 = vpack.c.bf16 %v1364, %v1350
      %v1444 = vpack.c.bf16 %v1390, %v1376
      %v1445 = vpack.c.bf16 %v1391, %v1377
      %v1446 = vpack.c.bf16 %v1392, %v1378
      %v1447 = vpack.c.bf16 %v1418, %v1404
      %v1448 = vpack.c.bf16 %v1419, %v1405
      %v1449 = vpack.c.bf16 %v1420, %v1406
      %v1450 = vpack.c.bf16 %v1432, %v1432
      %v1451 = vpack.c.bf16 %v1433, %v1433
      %v1452 = vpack.c.bf16 %v1434, %v1434
      %1453 = vset.pattern.permute.xlu0 6
      %1454 = vperm.xlu0 %1453, %v383
      %v1455 = vpop.permute.xlu0 %1454
      %vm1457 = vcmask 588800
      %v1459 = vsel %vm1457, %v1317, 0
      %vm1461 = vcmask 1043456
      %v1463 = vsel %vm1461, %v1450, 0
      %v1466 = vsel %vm1461, %v1451, 0
      %v1469 = vsel %vm1461, %v1452, 0
      %1471 = vmatprep.subr.bf16.mxu0 %v1439
      %1472 = vmatpush1.bf16.msra.mxu0 %v1438
      %1473 = vmatprep.subr.bf16.mxu0 %v1442
      %1474 = vmatpush1.bf16.msra.mxu0 %v1441
      %1475 = vmatprep.subr.bf16.mxu0 %v1445
      %1476 = vmatpush1.bf16.msra.mxu0 %v1444
      %1477 = vmatprep.subr.bf16.mxu0 %v1448
      %1478 = vmatpush1.bf16.msra.mxu0 %v1447
      %1479 = vmatprep.subr.bf16.mxu0 %v1466
      %1480 = vmatpush1.bf16.msra.mxu0 %v1463
      %1481 = vmatprep.subr.bf16.mxu0 0
      %1482 = vmatpush1.bf16.msra.mxu0 0
      %1483 = vmatprep.subr.bf16.mxu0 0
      %1484 = vmatpush1.bf16.msra.mxu0 0
      %1485 = vmatprep.subr.bf16.mxu0 0
      %1486 = vmatpush1.bf16.msra.mxu0 0
      %1487 = vmatprep.subr.bf16.mxu0 0
      %1488 = vmatpush1.bf16.msra.mxu0 0
      %1489 = vmatprep.subr.bf16.mxu0 0
      %1490 = vmatpush1.bf16.msra.mxu0 0
      %1491 = vmatprep.subr.bf16.mxu0 0
      %1492 = vmatpush1.bf16.msra.mxu0 0
      %1493 = vmatprep.subr.bf16.mxu0 0
      %1494 = vmatpush1.bf16.msra.mxu0 0
      %1495 = vmatprep.subr.bf16.mxu0 0
      %1496 = vmatpush1.bf16.msra.mxu0 0
      %1497 = vmatprep.subr.bf16.mxu0 0
      %1498 = vmatpush1.bf16.msra.mxu0 0
      %1499 = vmatprep.subr.bf16.mxu0 0
      %1500 = vmatpush1.bf16.msra.mxu0 0
      %1501 = vmatprep.subr.bf16.mxu0 0
      %1502 = vmatpush1.bf16.msra.mxu0 0
      %1503 = vmatprep.mubr.bf16.mxu0 0
      %1504 = vmatmul.mubr.bf16.gmra.mrb[0].mxu0 %v1459
      %v1505 = vpop.f32.mrb[0].mxu0
      %v1506 = vadd.f32 %v1455, %v1505
      %v1507 = vpop.f32.mrb[0].mxu0
      %v1508 = vadd.f32 %v1455, %v1507
      %v1509 = vpop.f32.mrb[0].mxu0
      %v1510 = vpop.f32.mrb[0].mxu0
      %1511 = vdwg.mxu0
      %1512 = vmatprep.subr.bf16.mxu0 0
      %1513 = vmatpush1.bf16.msra.mxu0 %v1440
      %1514 = vmatprep.subr.bf16.mxu0 0
      %1515 = vmatpush1.bf16.msra.mxu0 %v1443
      %1516 = vmatprep.subr.bf16.mxu0 0
      %1517 = vmatpush1.bf16.msra.mxu0 %v1446
      %1518 = vmatprep.subr.bf16.mxu0 0
      %1519 = vmatpush1.bf16.msra.mxu0 %v1449
      %1520 = vmatprep.subr.bf16.mxu0 0
      %1521 = vmatpush1.bf16.msra.mxu0 %v1469
      %1522 = vmatprep.subr.bf16.mxu0 0
      %1523 = vmatpush1.bf16.msra.mxu0 0
      %1524 = vmatprep.subr.bf16.mxu0 0
      %1525 = vmatpush1.bf16.msra.mxu0 0
      %1526 = vmatprep.subr.bf16.mxu0 0
      %1527 = vmatpush1.bf16.msra.mxu0 0
      %1528 = vmatprep.subr.bf16.mxu0 0
      %1529 = vmatpush1.bf16.msra.mxu0 0
      %1530 = vmatprep.subr.bf16.mxu0 0
      %1531 = vmatpush1.bf16.msra.mxu0 0
      %1532 = vmatprep.subr.bf16.mxu0 0
      %1533 = vmatpush1.bf16.msra.mxu0 0
      %1534 = vmatprep.subr.bf16.mxu0 0
      %1535 = vmatpush1.bf16.msra.mxu0 0
      %1536 = vmatprep.subr.bf16.mxu0 0
      %1537 = vmatpush1.bf16.msra.mxu0 0
      %1538 = vmatprep.subr.bf16.mxu0 0
      %1539 = vmatpush1.bf16.msra.mxu0 0
      %1540 = vmatprep.subr.bf16.mxu0 0
      %1541 = vmatpush1.bf16.msra.mxu0 0
      %1542 = vmatprep.subr.bf16.mxu0 0
      %1543 = vmatpush1.bf16.msra.mxu0 0
      %1544 = vmatprep.mubr.bf16.mxu0 0
      %1545 = vmatmul.mubr.bf16.gmra.mrb[0].mxu0 %v1459
      %v1546 = vpop.f32.mrb[0].mxu0
      %v1547 = vadd.f32 %v1455, %v1546
      %v1548 = vpop.f32.mrb[0].mxu0
      %v1549 = vpop.f32.mrb[0].mxu0
      %v1550 = vpop.f32.mrb[0].mxu0
      %1551 = vdwg.mxu0
      %v1552 = vmul.f32 %v1506, %v607
      %v1553 = vmul.f32 %v1508, %v611
      %v1554 = vmul.f32 %v1547, %v615
      %v1555 = vadd.f32 %v1552, %v1553
      %v1556 = vadd.f32 %v1555, %v1554
      %1557 = vadd.xlane.f32.xlu0 %v1556
      %v1558 = vpop.xlane.xlu0 %1557
      %v1559 = vmul.f32 %v1552, %v1506
      %v1560 = vmul.f32 %v1553, %v1508
      %v1561 = vmul.f32 %v1554, %v1547
      %v1562 = vadd.f32 %v1559, %v1560
      %v1563 = vadd.f32 %v1562, %v1561
      %1564 = vadd.xlane.f32.xlu0 %v1563
      %v1565 = vpop.xlane.xlu0 %1564
      %v1566 = vsel %vm633, %v1558, %v1565
      %1567 = vmatprep.subr.mxu0 0.0
      %1568 = vmatpush1.msra.mxu0 %v1566
      %1569 = vmatprep.subr.mxu0 0.0
      %1570 = vmatpush1.msra.mxu0 0.0
      %1571 = vmatprep.subr.mxu0 0.0
      %1572 = vmatpush1.msra.mxu0 0.0
      %1573 = vmatprep.subr.mxu0 0.0
      %1574 = vmatpush1.msra.mxu0 0.0
      %1575 = vmatprep.subr.mxu0 0.0
      %1576 = vmatpush1.msra.mxu0 0.0
      %1577 = vmatprep.subr.mxu0 0.0
      %1578 = vmatpush1.msra.mxu0 0.0
      %1579 = vmatprep.subr.mxu0 0.0
      %1580 = vmatpush1.msra.mxu0 0.0
      %1581 = vmatprep.subr.mxu0 0.0
      %1582 = vmatpush1.msra.mxu0 0.0
      %1583 = vmatprep.subr.mxu0 0.0
      %1584 = vmatpush1.msra.mxu0 0.0
      %1585 = vmatprep.subr.mxu0 0.0
      %1586 = vmatpush1.msra.mxu0 0.0
      %1587 = vmatprep.subr.mxu0 0.0
      %1588 = vmatpush1.msra.mxu0 0.0
      %1589 = vmatprep.subr.mxu0 0.0
      %1590 = vmatpush1.msra.mxu0 0.0
      %1591 = vmatprep.subr.mxu0 0.0
      %1592 = vmatpush1.msra.mxu0 0.0
      %1593 = vmatprep.subr.mxu0 0.0
      %1594 = vmatpush1.msra.mxu0 0.0
      %1595 = vmatprep.subr.mxu0 0.0
      %1596 = vmatpush1.msra.mxu0 0.0
      %1597 = vmatprep.subr.mxu0 0.0
      %1598 = vmatpush1.msra.mxu0 0.0
      %1599 = vmatprep.subr.mxu0 0.0
      %1600 = vmatpush1.msra.mxu0 0.0
      %1601 = vmatprep.subr.mxu0 0.0
      %1602 = vmatpush1.msra.mxu0 0.0
      %1603 = vmatprep.subr.mxu0 0.0
      %1604 = vmatpush1.msra.mxu0 0.0
      %1605 = vmatprep.subr.mxu0 0.0
      %1606 = vmatpush1.msra.mxu0 0.0
      %1607 = vmatprep.subr.mxu0 0.0
      %1608 = vmatpush1.msra.mxu0 0.0
      %1609 = vmatprep.subr.mxu0 0.0
      %1610 = vmatpush1.msra.mxu0 0.0
      %1611 = vmatprep.subr.mxu0 0.0
      %1612 = vmatpush1.msra.mxu0 0.0
      %1613 = vmatprep.subr.mxu0 0.0
      %1614 = vmatpush1.msra.mxu0 0.0
      %1615 = vmatprep.subr.mxu0 0.0
      %1616 = vmatpush1.msra.mxu0 0.0
      %1617 = vmatprep.subr.mxu0 0.0
      %1618 = vmatpush1.msra.mxu0 0.0
      %1619 = vmatprep.subr.mxu0 0.0
      %1620 = vmatpush1.msra.mxu0 0.0
      %1621 = vmatprep.subr.mxu0 0.0
      %1622 = vmatpush1.msra.mxu0 0.0
      %1623 = vmatprep.subr.mxu0 0.0
      %1624 = vmatpush1.msra.mxu0 0.0
      %1625 = vmatprep.subr.mxu0 0.0
      %1626 = vmatpush1.msra.mxu0 0.0
      %1627 = vmatprep.subr.mxu0 0.0
      %1628 = vmatpush1.msra.mxu0 0.0
      %1629 = vmatprep.subr.mxu0 0.0
      %1630 = vmatpush1.msra.mxu0 0.0
      %1631 = vmatprep.mubr.f32.mxu0 0.0
      %1632 = vmatmul.mubr.f32.gmra.mrb[0].mxu0 %v637
      %v1633 = vpop.f32.mrb[0].mxu0
      %v1634 = vadd.f32 0.0, %v1633
      %v1635 = vpop.f32.mrb[0].mxu0
      %1636 = vdwg.mxu0
      %v1637 = vmul.f32 %v1634, 0.0009765625
      %v1638 = vmul.f32 %v1637, %v1637
      %1640 = vrot.lane.b32.xlu0 %v1638, 1
      %v1641 = vpop.permute.xlu0 %1640
      %v1643 = vsub.f32 %v1637, %v1641
      %v1644 = vmax.f32 %v1643, 0.0
      %1646 = vset.pattern.permute.xlu0 0
      %1647 = vperm.xlu0 %1646, %v1637
      %v1648 = vpop.permute.xlu0 %1647
      %v1650 = vsub.f32 %v1506, %v1648
      %v1651 = vsub.f32 %v1508, %v1648
      %v1652 = vsub.f32 %v1547, %v1648
      %v1653 = vadd.f32 %v1644, 1e-05
      %v1654 = vrsqrt.pop %v1653
      %1656 = vset.pattern.permute.xlu0 1
      %1657 = vperm.xlu0 %1656, %v1654
      %v1658 = vpop.permute.xlu0 %1657
      %v1660 = vmul.f32 %v1650, %v1658
      %v1661 = vmul.f32 %v1651, %v1658
      %v1662 = vmul.f32 %v1652, %v1658
      %1663 = vset.pattern.permute.xlu0 7
      %1664 = vperm.xlu0 %1663, %v383
      %v1665 = vpop.permute.xlu0 %1664
      %v1667 = vmul.f32 %v1660, %v1665
      %v1668 = vmul.f32 %v1661, %v1665
      %v1669 = vmul.f32 %v1662, %v1665
      %1670 = vset.pattern.permute.xlu0 8
      %1671 = vperm.xlu0 %1670, %v383
      %v1672 = vpop.permute.xlu0 %1671
      %v1674 = vadd.f32 %v1667, %v1672
      %v1675 = vadd.f32 %v1668, %v1672
      %v1676 = vadd.f32 %v1669, %v1672
      %vm1677 = vcmp.ge.f32.partialorder %v1674, 0.0
      %vm1678 = vcmp.ge.f32.partialorder %v1675, 0.0
      %vm1679 = vcmp.ge.f32.partialorder %v1676, 0.0
      %v1680 = vmul.f32 %v1674, 0.01
      %v1681 = vmul.f32 %v1675, 0.01
      %v1682 = vmul.f32 %v1676, 0.01
      %v1683 = vsel %vm1677, %v1674, %v1680
      %v1684 = vsel %vm1678, %v1675, %v1681
      %v1685 = vsel %vm1679, %v1676, %v1682
      %v1686 = vmul.f32 %v1683, %v607
      %v1687 = vmul.f32 %v1684, %v611
      %v1688 = vmul.f32 %v1685, %v615
      %1689 = vst [vmem:[#allocation4] sm:$0xff] 0.0
      %1690 = vst [vmem:[#allocation4 + $0x8] sm:$0xff] 0.0
      %1691 = vst [vmem:[#allocation4 + $0x10] sm:$0xff] 0.0
      %1692 = vst.msk [vmem:[#allocation4 + $0x18] sm:$0xff] %vm764, 0.0
      %1696 = vrot.lane.b32.xlu0 %v1686, 25
      %v1697 = vpop.permute.xlu0 %1696
      %1698 = vrot.lane.b32.xlu0 %v1687, 25
      %v1699 = vpop.permute.xlu0 %1698
      %1700 = vrot.lane.b32.xlu0 %v1688, 25
      %v1701 = vpop.permute.xlu0 %1700
      %v1702 = vsel %vm775, %v1697, %v1699
      %v1703 = vsel %vm775, %v1699, %v1701
      %1708 = vst.msk [vmem:[#allocation4] sm:$0xff] %vm782, %v1697
      %1709 = vst [vmem:[#allocation4 + $0x8] sm:$0xff] %v1702
      %1710 = vst [vmem:[#allocation4 + $0x10] sm:$0xff] %v1703
      %1711 = vst.msk [vmem:[#allocation4 + $0x18] sm:$0xff] %vm775, %v1701
      %v1712 = vld [vmem:[%s6] sm:$0xf]
      %v1713 = vld [vmem:[#allocation4] sm:$0xff]
      %v1714 = vld [vmem:[#allocation4 + $0x8] sm:$0xff]
      %v1715 = vld [vmem:[#allocation4 + $0x10] sm:$0xff]
      %v1716 = vld [vmem:[#allocation4 + $0x18] sm:$0xff]
      %1721 = vrot.lane.b32.xlu0 %v1713, 127
      %v1722 = vpop.permute.xlu0 %1721
      %1723 = vrot.lane.b32.xlu0 %v1714, 127
      %v1724 = vpop.permute.xlu0 %1723
      %1725 = vrot.lane.b32.xlu0 %v1715, 127
      %v1726 = vpop.permute.xlu0 %1725
      %1727 = vrot.lane.b32.xlu0 %v1716, 127
      %v1728 = vpop.permute.xlu0 %1727
      %v1729 = vsel %vm808, %v1722, %v1724
      %v1730 = vsel %vm808, %v1724, %v1726
      %v1731 = vsel %vm808, %v1726, %v1728
      %1735 = vrot.lane.b32.xlu0 %v1713, 126
      %v1736 = vpop.permute.xlu0 %1735
      %1737 = vrot.lane.b32.xlu0 %v1714, 126
      %v1738 = vpop.permute.xlu0 %1737
      %1739 = vrot.lane.b32.xlu0 %v1715, 126
      %v1740 = vpop.permute.xlu0 %1739
      %1741 = vrot.lane.b32.xlu0 %v1716, 126
      %v1742 = vpop.permute.xlu0 %1741
      %v1743 = vsel %vm841, %v1736, %v1738
      %v1744 = vsel %vm841, %v1738, %v1740
      %v1745 = vsel %vm841, %v1740, %v1742
      %1749 = vrot.lane.b32.xlu0 %v1713, 104
      %v1750 = vpop.permute.xlu0 %1749
      %1751 = vrot.lane.b32.xlu0 %v1714, 104
      %v1752 = vpop.permute.xlu0 %1751
      %1753 = vrot.lane.b32.xlu0 %v1715, 104
      %v1754 = vpop.permute.xlu0 %1753
      %1755 = vrot.lane.b32.xlu0 %v1716, 104
      %v1756 = vpop.permute.xlu0 %1755
      %v1757 = vsel %vm870, %v1750, %v1752
      %v1758 = vsel %vm870, %v1752, %v1754
      %v1759 = vsel %vm870, %v1754, %v1756
      %1763 = vrot.lane.b32.xlu0 %v1713, 103
      %v1764 = vpop.permute.xlu0 %1763
      %1765 = vrot.lane.b32.xlu0 %v1714, 103
      %v1766 = vpop.permute.xlu0 %1765
      %1767 = vrot.lane.b32.xlu0 %v1715, 103
      %v1768 = vpop.permute.xlu0 %1767
      %1769 = vrot.lane.b32.xlu0 %v1716, 103
      %v1770 = vpop.permute.xlu0 %1769
      %v1771 = vsel %vm899, %v1764, %v1766
      %v1772 = vsel %vm899, %v1766, %v1768
      %v1773 = vsel %vm899, %v1768, %v1770
      %1777 = vrot.lane.b32.xlu0 %v1713, 102
      %v1778 = vpop.permute.xlu0 %1777
      %1779 = vrot.lane.b32.xlu0 %v1714, 102
      %v1780 = vpop.permute.xlu0 %1779
      %1781 = vrot.lane.b32.xlu0 %v1715, 102
      %v1782 = vpop.permute.xlu0 %1781
      %1783 = vrot.lane.b32.xlu0 %v1716, 102
      %v1784 = vpop.permute.xlu0 %1783
      %v1785 = vsel %vm928, %v1778, %v1780
      %v1786 = vsel %vm928, %v1780, %v1782
      %v1787 = vsel %vm928, %v1782, %v1784
      %1791 = vrot.lane.b32.xlu0 %v1713, 80
      %v1792 = vpop.permute.xlu0 %1791
      %1793 = vrot.lane.b32.xlu0 %v1714, 80
      %v1794 = vpop.permute.xlu0 %1793
      %1795 = vrot.lane.b32.xlu0 %v1715, 80
      %v1796 = vpop.permute.xlu0 %1795
      %1797 = vrot.lane.b32.xlu0 %v1716, 80
      %v1798 = vpop.permute.xlu0 %1797
      %v1799 = vsel %vm957, %v1792, %v1794
      %v1800 = vsel %vm957, %v1794, %v1796
      %v1801 = vsel %vm957, %v1796, %v1798
      %1805 = vrot.lane.b32.xlu0 %v1713, 79
      %v1806 = vpop.permute.xlu0 %1805
      %1807 = vrot.lane.b32.xlu0 %v1714, 79
      %v1808 = vpop.permute.xlu0 %1807
      %1809 = vrot.lane.b32.xlu0 %v1715, 79
      %v1810 = vpop.permute.xlu0 %1809
      %1811 = vrot.lane.b32.xlu0 %v1716, 79
      %v1812 = vpop.permute.xlu0 %1811
      %v1813 = vsel %vm986, %v1806, %v1808
      %v1814 = vsel %vm986, %v1808, %v1810
      %v1815 = vsel %vm986, %v1810, %v1812
      %1819 = vrot.lane.b32.xlu0 %v1713, 78
      %v1820 = vpop.permute.xlu0 %1819
      %1821 = vrot.lane.b32.xlu0 %v1714, 78
      %v1822 = vpop.permute.xlu0 %1821
      %1823 = vrot.lane.b32.xlu0 %v1715, 78
      %v1824 = vpop.permute.xlu0 %1823
      %1825 = vrot.lane.b32.xlu0 %v1716, 78
      %v1826 = vpop.permute.xlu0 %1825
      %v1827 = vsel %vm1023, %v1820, %v1822
      %v1828 = vsel %vm1023, %v1822, %v1824
      %v1829 = vsel %vm1023, %v1824, %v1826
      %v1833 = vpack.c.bf16 %v1729, %v1713
      %v1834 = vpack.c.bf16 %v1730, %v1714
      %v1835 = vpack.c.bf16 %v1731, %v1715
      %v1836 = vpack.c.bf16 %v1757, %v1743
      %v1837 = vpack.c.bf16 %v1758, %v1744
      %v1838 = vpack.c.bf16 %v1759, %v1745
      %v1839 = vpack.c.bf16 %v1785, %v1771
      %v1840 = vpack.c.bf16 %v1786, %v1772
      %v1841 = vpack.c.bf16 %v1787, %v1773
      %v1842 = vpack.c.bf16 %v1813, %v1799
      %v1843 = vpack.c.bf16 %v1814, %v1800
      %v1844 = vpack.c.bf16 %v1815, %v1801
      %v1845 = vpack.c.bf16 %v1827, %v1827
      %v1846 = vpack.c.bf16 %v1828, %v1828
      %v1847 = vpack.c.bf16 %v1829, %v1829
      %1848 = vset.pattern.permute.xlu0 9
      %1849 = vperm.xlu0 %1848, %v383
      %v1850 = vpop.permute.xlu0 %1849
      %v1853 = vsel %vm1457, %v1712, 0
      %v1856 = vsel %vm1461, %v1845, 0
      %v1859 = vsel %vm1461, %v1846, 0
      %v1862 = vsel %vm1461, %v1847, 0
      %1864 = vmatprep.subr.bf16.mxu0 %v1834
      %1865 = vmatpush1.bf16.msra.mxu0 %v1833
      %1866 = vmatprep.subr.bf16.mxu0 %v1837
      %1867 = vmatpush1.bf16.msra.mxu0 %v1836
      %1868 = vmatprep.subr.bf16.mxu0 %v1840
      %1869 = vmatpush1.bf16.msra.mxu0 %v1839
      %1870 = vmatprep.subr.bf16.mxu0 %v1843
      %1871 = vmatpush1.bf16.msra.mxu0 %v1842
      %1872 = vmatprep.subr.bf16.mxu0 %v1859
      %1873 = vmatpush1.bf16.msra.mxu0 %v1856
      %1874 = vmatprep.subr.bf16.mxu0 0
      %1875 = vmatpush1.bf16.msra.mxu0 0
      %1876 = vmatprep.subr.bf16.mxu0 0
      %1877 = vmatpush1.bf16.msra.mxu0 0
      %1878 = vmatprep.subr.bf16.mxu0 0
      %1879 = vmatpush1.bf16.msra.mxu0 0
      %1880 = vmatprep.subr.bf16.mxu0 0
      %1881 = vmatpush1.bf16.msra.mxu0 0
      %1882 = vmatprep.subr.bf16.mxu0 0
      %1883 = vmatpush1.bf16.msra.mxu0 0
      %1884 = vmatprep.subr.bf16.mxu0 0
      %1885 = vmatpush1.bf16.msra.mxu0 0
      %1886 = vmatprep.subr.bf16.mxu0 0
      %1887 = vmatpush1.bf16.msra.mxu0 0
      %1888 = vmatprep.subr.bf16.mxu0 0
      %1889 = vmatpush1.bf16.msra.mxu0 0
      %1890 = vmatprep.subr.bf16.mxu0 0
      %1891 = vmatpush1.bf16.msra.mxu0 0
      %1892 = vmatprep.subr.bf16.mxu0 0
      %1893 = vmatpush1.bf16.msra.mxu0 0
      %1894 = vmatprep.subr.bf16.mxu0 0
      %1895 = vmatpush1.bf16.msra.mxu0 0
      %1896 = vmatprep.mubr.bf16.mxu0 0
      %1897 = vmatmul.mubr.bf16.gmra.mrb[0].mxu0 %v1853
      %v1898 = vpop.f32.mrb[0].mxu0
      %v1899 = vadd.f32 %v1850, %v1898
      %v1900 = vpop.f32.mrb[0].mxu0
      %v1901 = vadd.f32 %v1850, %v1900
      %v1902 = vpop.f32.mrb[0].mxu0
      %v1903 = vpop.f32.mrb[0].mxu0
      %1904 = vdwg.mxu0
      %1905 = vmatprep.subr.bf16.mxu0 0
      %1906 = vmatpush1.bf16.msra.mxu0 %v1835
      %1907 = vmatprep.subr.bf16.mxu0 0
      %1908 = vmatpush1.bf16.msra.mxu0 %v1838
      %1909 = vmatprep.subr.bf16.mxu0 0
      %1910 = vmatpush1.bf16.msra.mxu0 %v1841
      %1911 = vmatprep.subr.bf16.mxu0 0
      %1912 = vmatpush1.bf16.msra.mxu0 %v1844
      %1913 = vmatprep.subr.bf16.mxu0 0
      %1914 = vmatpush1.bf16.msra.mxu0 %v1862
      %1915 = vmatprep.subr.bf16.mxu0 0
      %1916 = vmatpush1.bf16.msra.mxu0 0
      %1917 = vmatprep.subr.bf16.mxu0 0
      %1918 = vmatpush1.bf16.msra.mxu0 0
      %1919 = vmatprep.subr.bf16.mxu0 0
      %1920 = vmatpush1.bf16.msra.mxu0 0
      %1921 = vmatprep.subr.bf16.mxu0 0
      %1922 = vmatpush1.bf16.msra.mxu0 0
      %1923 = vmatprep.subr.bf16.mxu0 0
      %1924 = vmatpush1.bf16.msra.mxu0 0
      %1925 = vmatprep.subr.bf16.mxu0 0
      %1926 = vmatpush1.bf16.msra.mxu0 0
      %1927 = vmatprep.subr.bf16.mxu0 0
      %1928 = vmatpush1.bf16.msra.mxu0 0
      %1929 = vmatprep.subr.bf16.mxu0 0
      %1930 = vmatpush1.bf16.msra.mxu0 0
      %1931 = vmatprep.subr.bf16.mxu0 0
      %1932 = vmatpush1.bf16.msra.mxu0 0
      %1933 = vmatprep.subr.bf16.mxu0 0
      %1934 = vmatpush1.bf16.msra.mxu0 0
      %1935 = vmatprep.subr.bf16.mxu0 0
      %1936 = vmatpush1.bf16.msra.mxu0 0
      %1937 = vmatprep.mubr.bf16.mxu0 0
      %1938 = vmatmul.mubr.bf16.gmra.mrb[0].mxu0 %v1853
      %v1939 = vpop.f32.mrb[0].mxu0
      %v1940 = vadd.f32 %v1850, %v1939
      %v1941 = vpop.f32.mrb[0].mxu0
      %v1942 = vpop.f32.mrb[0].mxu0
      %v1943 = vpop.f32.mrb[0].mxu0
      %1944 = vdwg.mxu0
      %v1945 = vmul.f32 %v1899, %v607
      %v1946 = vmul.f32 %v1901, %v611
      %v1947 = vmul.f32 %v1940, %v615
      %v1948 = vadd.f32 %v1945, %v1946
      %v1949 = vadd.f32 %v1948, %v1947
      %1950 = vadd.xlane.f32.xlu0 %v1949
      %v1951 = vpop.xlane.xlu0 %1950
      %v1952 = vmul.f32 %v1945, %v1899
      %v1953 = vmul.f32 %v1946, %v1901
      %v1954 = vmul.f32 %v1947, %v1940
      %v1955 = vadd.f32 %v1952, %v1953
      %v1956 = vadd.f32 %v1955, %v1954
      %1957 = vadd.xlane.f32.xlu0 %v1956
      %v1958 = vpop.xlane.xlu0 %1957
      %v1959 = vsel %vm633, %v1951, %v1958
      %1960 = vmatprep.subr.mxu0 0.0
      %1961 = vmatpush1.msra.mxu0 %v1959
      %1962 = vmatprep.subr.mxu0 0.0
      %1963 = vmatpush1.msra.mxu0 0.0
      %1964 = vmatprep.subr.mxu0 0.0
      %1965 = vmatpush1.msra.mxu0 0.0
      %1966 = vmatprep.subr.mxu0 0.0
      %1967 = vmatpush1.msra.mxu0 0.0
      %1968 = vmatprep.subr.mxu0 0.0
      %1969 = vmatpush1.msra.mxu0 0.0
      %1970 = vmatprep.subr.mxu0 0.0
      %1971 = vmatpush1.msra.mxu0 0.0
      %1972 = vmatprep.subr.mxu0 0.0
      %1973 = vmatpush1.msra.mxu0 0.0
      %1974 = vmatprep.subr.mxu0 0.0
      %1975 = vmatpush1.msra.mxu0 0.0
      %1976 = vmatprep.subr.mxu0 0.0
      %1977 = vmatpush1.msra.mxu0 0.0
      %1978 = vmatprep.subr.mxu0 0.0
      %1979 = vmatpush1.msra.mxu0 0.0
      %1980 = vmatprep.subr.mxu0 0.0
      %1981 = vmatpush1.msra.mxu0 0.0
      %1982 = vmatprep.subr.mxu0 0.0
      %1983 = vmatpush1.msra.mxu0 0.0
      %1984 = vmatprep.subr.mxu0 0.0
      %1985 = vmatpush1.msra.mxu0 0.0
      %1986 = vmatprep.subr.mxu0 0.0
      %1987 = vmatpush1.msra.mxu0 0.0
      %1988 = vmatprep.subr.mxu0 0.0
      %1989 = vmatpush1.msra.mxu0 0.0
      %1990 = vmatprep.subr.mxu0 0.0
      %1991 = vmatpush1.msra.mxu0 0.0
      %1992 = vmatprep.subr.mxu0 0.0
      %1993 = vmatpush1.msra.mxu0 0.0
      %1994 = vmatprep.subr.mxu0 0.0
      %1995 = vmatpush1.msra.mxu0 0.0
      %1996 = vmatprep.subr.mxu0 0.0
      %1997 = vmatpush1.msra.mxu0 0.0
      %1998 = vmatprep.subr.mxu0 0.0
      %1999 = vmatpush1.msra.mxu0 0.0
      %2000 = vmatprep.subr.mxu0 0.0
      %2001 = vmatpush1.msra.mxu0 0.0
      %2002 = vmatprep.subr.mxu0 0.0
      %2003 = vmatpush1.msra.mxu0 0.0
      %2004 = vmatprep.subr.mxu0 0.0
      %2005 = vmatpush1.msra.mxu0 0.0
      %2006 = vmatprep.subr.mxu0 0.0
      %2007 = vmatpush1.msra.mxu0 0.0
      %2008 = vmatprep.subr.mxu0 0.0
      %2009 = vmatpush1.msra.mxu0 0.0
      %2010 = vmatprep.subr.mxu0 0.0
      %2011 = vmatpush1.msra.mxu0 0.0
      %2012 = vmatprep.subr.mxu0 0.0
      %2013 = vmatpush1.msra.mxu0 0.0
      %2014 = vmatprep.subr.mxu0 0.0
      %2015 = vmatpush1.msra.mxu0 0.0
      %2016 = vmatprep.subr.mxu0 0.0
      %2017 = vmatpush1.msra.mxu0 0.0
      %2018 = vmatprep.subr.mxu0 0.0
      %2019 = vmatpush1.msra.mxu0 0.0
      %2020 = vmatprep.subr.mxu0 0.0
      %2021 = vmatpush1.msra.mxu0 0.0
      %2022 = vmatprep.subr.mxu0 0.0
      %2023 = vmatpush1.msra.mxu0 0.0
      %2024 = vmatprep.mubr.f32.mxu0 0.0
      %2025 = vmatmul.mubr.f32.gmra.mrb[0].mxu0 %v637
      %v2026 = vpop.f32.mrb[0].mxu0
      %v2027 = vadd.f32 0.0, %v2026
      %v2028 = vpop.f32.mrb[0].mxu0
      %2029 = vdwg.mxu0
      %v2030 = vmul.f32 %v2027, 0.0009765625
      %v2031 = vmul.f32 %v2030, %v2030
      %2033 = vrot.lane.b32.xlu0 %v2031, 1
      %v2034 = vpop.permute.xlu0 %2033
      %v2036 = vsub.f32 %v2030, %v2034
      %v2037 = vmax.f32 %v2036, 0.0
      %2039 = vset.pattern.permute.xlu0 0
      %2040 = vperm.xlu0 %2039, %v2030
      %v2041 = vpop.permute.xlu0 %2040
      %v2043 = vsub.f32 %v1899, %v2041
      %v2044 = vsub.f32 %v1901, %v2041
      %v2045 = vsub.f32 %v1940, %v2041
      %v2046 = vadd.f32 %v2037, 1e-05
      %v2047 = vrsqrt.pop %v2046
      %2049 = vset.pattern.permute.xlu0 1
      %2050 = vperm.xlu0 %2049, %v2047
      %v2051 = vpop.permute.xlu0 %2050
      %v2053 = vmul.f32 %v2043, %v2051
      %v2054 = vmul.f32 %v2044, %v2051
      %v2055 = vmul.f32 %v2045, %v2051
      %2056 = vset.pattern.permute.xlu0 10
      %2057 = vperm.xlu0 %2056, %v383
      %v2058 = vpop.permute.xlu0 %2057
      %v2060 = vmul.f32 %v2053, %v2058
      %v2061 = vmul.f32 %v2054, %v2058
      %v2062 = vmul.f32 %v2055, %v2058
      %2063 = vset.pattern.permute.xlu0 11
      %2064 = vperm.xlu0 %2063, %v383
      %v2065 = vpop.permute.xlu0 %2064
      %v2067 = vadd.f32 %v2060, %v2065
      %v2068 = vadd.f32 %v2061, %v2065
      %v2069 = vadd.f32 %v2062, %v2065
      %vm2070 = vcmp.ge.f32.partialorder %v2067, 0.0
      %vm2071 = vcmp.ge.f32.partialorder %v2068, 0.0
      %vm2072 = vcmp.ge.f32.partialorder %v2069, 0.0
      %v2073 = vmul.f32 %v2067, 0.01
      %v2074 = vmul.f32 %v2068, 0.01
      %v2075 = vmul.f32 %v2069, 0.01
      %v2076 = vsel %vm2070, %v2067, %v2073
      %v2077 = vsel %vm2071, %v2068, %v2074
      %v2078 = vsel %vm2072, %v2069, %v2075
      %v2079 = vmul.f32 %v2076, %v607
      %v2080 = vmul.f32 %v2077, %v611
      %v2081 = vmul.f32 %v2078, %v615
      %v2082 = vld [vmem:[#allocation3] sm:$0xff]
      %v2083 = vld [vmem:[#allocation3 + $0x8] sm:$0xff]
      %v2084 = vld [vmem:[#allocation3 + $0x10] sm:$0xff]
      %v2085 = vld [vmem:[#allocation3 + $0x18] sm:$0xff]
      %2090 = vrot.lane.b32.xlu0 %v2082, 103
      %v2091 = vpop.permute.xlu0 %2090
      %2092 = vrot.lane.b32.xlu0 %v2083, 103
      %v2093 = vpop.permute.xlu0 %2092
      %2094 = vrot.lane.b32.xlu0 %v2084, 103
      %v2095 = vpop.permute.xlu0 %2094
      %2096 = vrot.lane.b32.xlu0 %v2085, 103
      %v2097 = vpop.permute.xlu0 %2096
      %v2098 = vsel %vm899, %v2091, %v2093
      %v2099 = vsel %vm899, %v2093, %v2095
      %v2100 = vsel %vm899, %v2095, %v2097
      %v2104 = vadd.f32 %v2079, %v2098
      %v2105 = vadd.f32 %v2080, %v2099
      %v2106 = vadd.f32 %v2081, %v2100
      %2107 = vst [vmem:[%s379] sm:$0xff] %v2104
      %2108 = vst [vmem:[%s379 + $0x8] sm:$0xff] %v2105
      %2109 = vst [vmem:[%s379 + $0x10] sm:$0xff] %v2106
      %p2110 = scmp.lt.s32.totalorder %s21, 1
      %s2111 = scalar_select %p2110, %s21, 1
      %s2112 = smul.addr %s2111, 3
      %s2113 = smul.addr %s2112, 8
      %s2114 = scalar_lea.vmem %s10, %s2113
      // Predicated region
      $region61: #{up_convolution_block_forward.1} parent=59 // pred_check
        %p2115 = pneg %p259
      $region62: #{up_convolution_block_forward.1} parent=59 // pred_check_branch
        %2117 = sbr.rel (%p2115) target = $region64
      $region63: #{up_convolution_block_forward.1} parent=59 // pred_region
        _
      $region64: #{up_convolution_block_forward.1} parent=59 // pred_fallthru
        _
    $region60: #{up_convolution_block_forward.1} parent=5 // pred_fallthru
      _
    %p2118 = scmp.le.s32.totalorder 2, %s16
    // Predicated region
    $region65: #{up_convolution_block_forward.1} parent=5 // pred_check
      %p2119 = pneg %p2118
    $region66: #{up_convolution_block_forward.1} parent=5 // pred_check_branch
      %2121 = sbr.rel (%p2119) target = $region68
    $region67: #{up_convolution_block_forward.1} parent=5 // pred_region
      %s2122 = ssub.s32 %s16, 2
      // Predicated region
      $region69: #{up_convolution_block_forward.1} parent=67 // pred_check
        %p2123 = pneg %p265
      $region70: #{up_convolution_block_forward.1} parent=67 // pred_check_branch
        %2125 = sbr.rel (%p2123) target = $region72
      $region71: #{up_convolution_block_forward.1} parent=67 // pred_region
        %p2126 = scmp.lt.s32.totalorder %s22, 1
        %s2127 = scalar_select %p2126, %s22, 1
        %s2128 = smul.addr %s2127, 3
        %s2129 = smul.addr %s2128, 8
        %s2130 = scalar_lea.vmem %s10, %s2129
      $region72: #{up_convolution_block_forward.1} parent=67 // pred_fallthru
        _
    $region68: #{up_convolution_block_forward.1} parent=5 // pred_fallthru
      _
  $region6: #{up_convolution_block_forward.1} parent=0 // loop_footer
    %s20 = sadd.s32 1, %s16
  $region7: #{up_convolution_block_forward.1} parent=0 // loop_footer_branch
    %15 = sbr.rel target = $region3
  $region8: #{up_convolution_block_forward.1} parent=0 // loop_exit
    _

</llo_original>
